<compile_context>
chip_gen: v6e
topology: v6e:2x2x1
jax: 0.10.0
libtpu: 0.0.40
codegen_flags: <defaults>
</compile_context>

<pallas_src>
import functools

import jax
import jax.numpy as jnp
import numpy as np
from jax.experimental import pallas as pl
from jax.experimental.pallas import tpu as pltpu


# ----------------------------------------------------------------------------
# Fused Pallas kernel: qkv proj + windowed attention + out proj + bias + residual
# ----------------------------------------------------------------------------
def _fused_window_attn_kernel(x_ref, wqkv_ref, wout_ref, bout_ref, bias_ref,
                              o_ref, *, heads, head_dim):
    """One grid step: GC windows of one batch element, all heads.

    x/o blocks : (1, GC, WS2, dim)  (x streamed in input dtype; also residual)
    wqkv block : (3, H, dim, D)     bf16, resident (1/sqrt(D) folded into q)
    wout block : (H, D, dim)        bf16, resident
    bout block : (1, dim)           f32, resident
    bias block : (GC, WS2, WS2)     f32 (rel-pos bias + shift masks; may be -inf)
    """
    _, gc, ws2, dim = x_ref.shape
    x = x_ref[0]                                           # (gc, ws2, dim)
    x2 = x.reshape(gc * ws2, dim).astype(jnp.bfloat16)     # MXU operand
    bias = bias_ref[...]                                   # (gc, ws2, ws2) f32

    acc = jnp.zeros((gc * ws2, dim), jnp.float32)
    for h in range(heads):                                 # static unroll, heads small
        qh = jnp.dot(x2, wqkv_ref[0, h], preferred_element_type=jnp.float32)
        kh = jnp.dot(x2, wqkv_ref[1, h], preferred_element_type=jnp.float32)
        vh = jnp.dot(x2, wqkv_ref[2, h], preferred_element_type=jnp.float32)
        qh = qh.astype(jnp.bfloat16).reshape(gc, ws2, head_dim)
        kh = kh.astype(jnp.bfloat16).reshape(gc, ws2, head_dim)
        vh = vh.astype(jnp.bfloat16).reshape(gc, ws2, head_dim)

        s = jnp.einsum("gid,gjd->gij", qh, kh,
                       preferred_element_type=jnp.float32) + bias
        m = jnp.max(s, axis=-1, keepdims=True)
        p = jnp.exp(s - m)
        attn = p * pl.reciprocal(jnp.sum(p, axis=-1, keepdims=True), approx=True)
        oh = jnp.einsum("gij,gjd->gid", attn.astype(jnp.bfloat16), vh,
                        preferred_element_type=jnp.float32)   # (gc, ws2, D)

        # Fused output projection: concat_h(oh) @ w_out == sum_h oh @ w_out[h].
        acc = acc + jnp.dot(oh.reshape(gc * ws2, head_dim).astype(jnp.bfloat16),
                            wout_ref[h], preferred_element_type=jnp.float32)

    # + output bias + residual (the Residual module), residual kept full-precision.
    out = acc + bout_ref[...] + x.reshape(gc * ws2, dim).astype(jnp.float32)
    o_ref[0] = out.reshape(gc, ws2, dim).astype(o_ref.dtype)


def _pick_window_chunk(nw, batch, ws2, dim, budget_bytes=8 * 1024 * 1024):
    """Largest divisor of nw whose per-step footprint fits the budget, while
    keeping >= 2 steps on the parallel grid (2 TensorCores on v7x)."""
    # x + out blocks (f32, double-buffered) + bias + in-kernel f32 temporaries.
    per_window = 4 * ws2 * (2 * dim + 3 * ws2) * 4
    divisors = [d for d in range(1, nw + 1) if nw % d == 0]
    fitting = [d for d in divisors if d * per_window <= budget_bytes]
    gc = max(fitting) if fitting else 1
    if batch * (nw // gc) < 2:
        smaller = [d for d in divisors if d < gc and batch * (nw // d) >= 2]
        if smaller:
            gc = max(smaller)
    return gc


def fused_window_attention(x_win, w_qkv4, w_out3, b_out2, bias, *, heads, head_dim):
    """x_win: (B, NW, WS2, dim) -> (B, NW, WS2, dim) (attention + residual)."""
    B, NW, WS2, dim = x_win.shape
    gc = _pick_window_chunk(NW, B, WS2, dim)
    kern = functools.partial(_fused_window_attn_kernel, heads=heads,
                             head_dim=head_dim)

    # Grid (window-chunk, batch): bias index depends only on the outer axis, so
    # its block stays resident along the fast (batch) axis; weights are fully
    # resident (constant index_map).
    x_spec = pl.BlockSpec((1, gc, WS2, dim), lambda w, b: (b, w, 0, 0))
    wqkv_spec = pl.BlockSpec((3, heads, dim, head_dim), lambda w, b: (0, 0, 0, 0))
    wout_spec = pl.BlockSpec((heads, head_dim, dim), lambda w, b: (0, 0, 0))
    bout_spec = pl.BlockSpec((1, dim), lambda w, b: (0, 0))
    bias_spec = pl.BlockSpec((gc, WS2, WS2), lambda w, b: (w, 0, 0))

    return pl.pallas_call(
        kern,
        out_shape=jax.ShapeDtypeStruct((B, NW, WS2, dim), x_win.dtype),
        grid=(NW // gc, B),
        in_specs=[x_spec, wqkv_spec, wout_spec, bout_spec, bias_spec],
        out_specs=x_spec,
        input_output_aliases={0: 0},      # x_win is dead after the call
        compiler_params=pltpu.CompilerParams(
            dimension_semantics=("parallel", "parallel"),
            vmem_limit_bytes=48 * 1024 * 1024),
    )(x_win, w_qkv4, w_out3, b_out2, bias)


# ----------------------------------------------------------------------------
# Glue: masks / relative distances (numpy, mirrors the PyTorch helpers)
# ----------------------------------------------------------------------------
def create_mask(window_size, displacement, upper_lower, left_right):
    ws2 = window_size ** 2
    mask = np.zeros((ws2, ws2), dtype=np.float32)
    if upper_lower:
        mask[-displacement * window_size:, :-displacement * window_size] = -np.inf
        mask[:-displacement * window_size, -displacement * window_size:] = -np.inf
    if left_right:
        mask = mask.reshape(window_size, window_size, window_size, window_size)
        mask[:, -displacement:, :, :-displacement] = -np.inf
        mask[:, :-displacement, :, -displacement:] = -np.inf
        mask = mask.reshape(ws2, ws2)
    return mask


def get_relative_distances(window_size):
    indices = np.array(
        [[x, y] for x in range(window_size) for y in range(window_size)]
    )
    return indices[None, :, :] - indices[:, None, :]


# ----------------------------------------------------------------------------
# Residual(WindowAttention).forward  ==  window_attention(x) + x
# ----------------------------------------------------------------------------
def residual_window_attention_forward(x, params, *, heads, head_dim, window_size,
                                       shifted, relative_pos_embedding):
    b, n_h, n_w, dim = x.shape
    inner_dim = heads * head_dim
    ws = window_size
    ws2 = ws * ws
    nw_h, nw_w = n_h // ws, n_w // ws
    nw = nw_h * nw_w
    scale = head_dim ** (-0.5)
    disp = ws // 2

    x_s = jnp.roll(x, shift=(-disp, -disp), axis=(1, 2)) if shifted else x

    # Window-rearrange the INPUT once (instead of q/k/v three times):
    # b (nw_h w_h) (nw_w w_w) c -> b (nw_h nw_w) (w_h w_w) c
    x_win = x_s.reshape(b, nw_h, ws, nw_w, ws, dim)
    x_win = jnp.transpose(x_win, (0, 1, 3, 2, 4, 5)).reshape(b, nw, ws2, dim)

    # Weights: head-major layouts so the kernel slices heads along leading dims;
    # fold the softmax 1/sqrt(d) scale into q; cast to bf16 once.
    w_qkv4 = params["w_qkv"].reshape(dim, 3, heads, head_dim)
    w_qkv4 = jnp.transpose(w_qkv4, (1, 2, 0, 3))            # (3, H, dim, D)
    qscale = jnp.array([scale, 1.0, 1.0], jnp.float32).reshape(3, 1, 1, 1)
    w_qkv4 = (w_qkv4 * qscale).astype(jnp.bfloat16)
    w_out3 = params["w_out"].reshape(heads, head_dim, dim).astype(jnp.bfloat16)
    b_out2 = params["b_out"].reshape(1, dim).astype(jnp.float32)

    # Per-window additive bias: relative pos embedding + shift masks.
    if relative_pos_embedding:
        rel = params["relative_indices"]                    # (ws2, ws2, 2)
        pos_bias = params["pos_embedding"][rel[:, :, 0], rel[:, :, 1]]
    else:
        pos_bias = params["pos_embedding"]
    bias = jnp.broadcast_to(pos_bias, (nw, ws2, ws2))
    if shifted:
        w_idx = jnp.arange(nw)
        ul_sel = (w_idx >= nw - nw_w)[:, None, None]        # dots[:, :, -nw_w:]
        lr_sel = (w_idx % nw_w == nw_w - 1)[:, None, None]  # dots[:, :, nw_w-1::nw_w]
        bias = bias + jnp.where(ul_sel, params["upper_lower_mask"], 0.0)
        bias = bias + jnp.where(lr_sel, params["left_right_mask"], 0.0)
    bias = bias.astype(jnp.float32)

    # Fused qkv-proj + attention + out-proj + bias + residual (one Pallas call).
    # Residual is added in shifted coordinates: roll(a + x_s) = roll(a) + x.
    out_win = fused_window_attention(x_win, w_qkv4, w_out3, b_out2, bias,
                                     heads=heads, head_dim=head_dim)

    # Un-window back to image layout (still in shifted coordinates).
    out = out_win.reshape(b, nw_h, nw_w, ws, ws, dim)
    out = jnp.transpose(out, (0, 1, 3, 2, 4, 5)).reshape(b, n_h, n_w, dim)

    if shifted:
        out = jnp.roll(out, shift=(disp, disp), axis=(1, 2))
    return out


# Pure-JAX reference (f32, un-fused) for the correctness check.
def _reference_forward(x, params, *, heads, head_dim, window_size,
                       shifted, relative_pos_embedding):
    x_in = x
    b, n_h, n_w, dim = x.shape
    inner_dim = heads * head_dim
    ws = window_size
    ws2 = ws * ws
    nw_h, nw_w = n_h // ws, n_w // ws
    scale = head_dim ** (-0.5)
    disp = ws // 2

    if shifted:
        x = jnp.roll(x, shift=(-disp, -disp), axis=(1, 2))
    qkv = (x.reshape(-1, dim) @ params["w_qkv"]).reshape(b, n_h, n_w, 3 * inner_dim)
    q, k, v = jnp.split(qkv, 3, axis=-1)

    def to_windows(t):
        t = t.reshape(b, nw_h, ws, nw_w, ws, heads, head_dim)
        t = jnp.transpose(t, (0, 5, 1, 3, 2, 4, 6))
        return t.reshape(b, heads, nw_h * nw_w, ws2, head_dim)

    q, k, v = map(to_windows, (q, k, v))
    dots = jnp.einsum("bhwid,bhwjd->bhwij", q, k) * scale
    if relative_pos_embedding:
        rel = params["relative_indices"]
        dots = dots + params["pos_embedding"][rel[:, :, 0], rel[:, :, 1]]
    else:
        dots = dots + params["pos_embedding"]
    if shifted:
        dots = dots.at[:, :, -nw_w:].add(params["upper_lower_mask"])
        dots = dots.at[:, :, nw_w - 1::nw_w].add(params["left_right_mask"])
    attn = jax.nn.softmax(dots, axis=-1)
    out = jnp.einsum("bhwij,bhwjd->bhwid", attn, v)
    out = out.reshape(b, heads, nw_h, nw_w, ws, ws, head_dim)
    out = jnp.transpose(out, (0, 2, 4, 3, 5, 1, 6)).reshape(b, n_h, n_w, inner_dim)
    out = (out.reshape(-1, inner_dim) @ params["w_out"] + params["b_out"]).reshape(
        b, n_h, n_w, dim
    )
    if shifted:
        out = jnp.roll(out, shift=(disp, disp), axis=(1, 2))
    return out + x_in          # Residual


if __name__ == "__main__":
    # Small config consistent with the module.
    batch = 2
    dim = 32
    heads = 2
    head_dim = 16
    window_size = 4
    n_h = n_w = 8
    shifted = True
    relative_pos_embedding = True
    inner_dim = heads * head_dim
    disp = window_size // 2

    key = jax.random.PRNGKey(0)
    kx, kq, kp, kw, kb = jax.random.split(key, 5)
    x = jax.random.normal(kx, (batch, n_h, n_w, dim), jnp.float32)

    params = {
        # nn.Linear(dim, inner_dim*3, bias=False); stored here as (in, out)
        "w_qkv": jax.random.normal(kq, (dim, 3 * inner_dim), jnp.float32) * 0.1,
        # nn.Parameter(torch.randn(2*ws-1, 2*ws-1))
        "pos_embedding": jax.random.normal(
            kp, (2 * window_size - 1, 2 * window_size - 1), jnp.float32
        ),
        # nn.Linear(inner_dim, dim) with bias; stored as (in, out)
        "w_out": jax.random.normal(kw, (inner_dim, dim), jnp.float32) * 0.1,
        "b_out": jax.random.normal(kb, (dim,), jnp.float32) * 0.1,
        "relative_indices": np.asarray(
            get_relative_distances(window_size) + window_size - 1, dtype=np.int32
        ),
        "upper_lower_mask": jnp.asarray(
            create_mask(window_size, disp, upper_lower=True, left_right=False)
        ),
        "left_right_mask": jnp.asarray(
            create_mask(window_size, disp, upper_lower=False, left_right=True)
        ),
    }

    fwd = jax.jit(functools.partial(
        residual_window_attention_forward,
        heads=heads,
        head_dim=head_dim,
        window_size=window_size,
        shifted=shifted,
        relative_pos_embedding=relative_pos_embedding,
    ))
    out = jax.block_until_ready(fwd(x, params))

    ref = jax.block_until_ready(
        _reference_forward(
            x,
            params,
            heads=heads,
            head_dim=head_dim,
            window_size=window_size,
            shifted=shifted,
            relative_pos_embedding=relative_pos_embedding,
        )
    )
    assert out.shape == (batch, n_h, n_w, dim)
    # bf16 MXU operands vs f32 reference -> modest tolerance.
    np.testing.assert_allclose(np.asarray(out), np.asarray(ref), rtol=4e-2, atol=4e-2)
    print("KERNEL_OK")
</pallas_src>

<mosaic_0001>
module attributes {stable_mosaic.version = 11 : i64} {
  func.func @_fused_window_attn_kernel(%arg0: i32, %arg1: i32, %arg2: memref<1x4x16x32xf32, #tpu.memory_space<vmem>>, %arg3: memref<3x2x32x16xbf16, #tpu.memory_space<vmem>>, %arg4: memref<2x16x32xbf16, #tpu.memory_space<vmem>>, %arg5: memref<1x32xf32, #tpu.memory_space<vmem>>, %arg6: memref<4x16x16xf32, #tpu.memory_space<vmem>>, %arg7: memref<1x4x16x32xf32, #tpu.memory_space<vmem>>) attributes {dimension_semantics = [#tpu.dimension_semantics<parallel>, #tpu.dimension_semantics<parallel>], iteration_bounds = array<i64: 1, 2>, scalar_prefetch = 0 : i64, scratch_operands = 0 : i64, tpu.core_type = #tpu.core_type<tc>, window_params = [{transform_indices = @transform_0, window_bounds = array<i64: 1, 4, 16, 32>}, {pipeline_mode = #tpu.pipeline_mode<synchronous>, transform_indices = @transform_1, window_bounds = array<i64: 3, 2, 32, 16>}, {pipeline_mode = #tpu.pipeline_mode<synchronous>, transform_indices = @transform_2, window_bounds = array<i64: 2, 16, 32>}, {pipeline_mode = #tpu.pipeline_mode<synchronous>, transform_indices = @transform_3, window_bounds = array<i64: 1, 32>}, {transform_indices = @transform_4, window_bounds = array<i64: 4, 16, 16>}, {transform_indices = @transform_5, window_bounds = array<i64: 1, 4, 16, 32>}]} {
    %c0 = arith.constant 0 : index
    %c0_0 = arith.constant 0 : index
    %c0_1 = arith.constant 0 : index
    %c0_2 = arith.constant 0 : index
    %0 = vector.load %arg2[%c0, %c0_0, %c0_1, %c0_2] : memref<1x4x16x32xf32, #tpu.memory_space<vmem>>, vector<1x4x16x32xf32>
    %1 = vector.shape_cast %0 : vector<1x4x16x32xf32> to vector<4x16x32xf32>
    %2 = vector.shape_cast %1 : vector<4x16x32xf32> to vector<64x32xf32>
    %3 = arith.truncf %2 : vector<64x32xf32> to vector<64x32xbf16>
    %c0_3 = arith.constant 0 : index
    %c0_4 = arith.constant 0 : index
    %c0_5 = arith.constant 0 : index
    %4 = vector.load %arg6[%c0_3, %c0_4, %c0_5] : memref<4x16x16xf32, #tpu.memory_space<vmem>>, vector<4x16x16xf32>
    %cst = arith.constant 0.000000e+00 : f32
    %5 = vector.broadcast %cst : f32 to vector<64x32xf32>
    %c0_6 = arith.constant 0 : index
    %c0_7 = arith.constant 0 : index
    %c0_8 = arith.constant 0 : index
    %c0_9 = arith.constant 0 : index
    %6 = vector.load %arg3[%c0_6, %c0_7, %c0_8, %c0_9] : memref<3x2x32x16xbf16, #tpu.memory_space<vmem>>, vector<1x1x32x16xbf16>
    %7 = vector.shape_cast %6 : vector<1x1x32x16xbf16> to vector<32x16xbf16>
    %cst_10 = arith.constant dense<0.000000e+00> : vector<64x16xf32>
    %8 = tpu.matmul %3, %7, %cst_10 {dimension_numbers = #tpu.dot_dimension_numbers<[1], [0], [0], [1], [0, 0, 1, 1], [], []>} : vector<64x32xbf16>, vector<32x16xbf16>, vector<64x16xf32> -> vector<64x16xf32>
    %c1 = arith.constant 1 : index
    %c0_11 = arith.constant 0 : index
    %c0_12 = arith.constant 0 : index
    %c0_13 = arith.constant 0 : index
    %9 = vector.load %arg3[%c1, %c0_11, %c0_12, %c0_13] : memref<3x2x32x16xbf16, #tpu.memory_space<vmem>>, vector<1x1x32x16xbf16>
    %10 = vector.shape_cast %9 : vector<1x1x32x16xbf16> to vector<32x16xbf16>
    %cst_14 = arith.constant dense<0.000000e+00> : vector<64x16xf32>
    %11 = tpu.matmul %3, %10, %cst_14 {dimension_numbers = #tpu.dot_dimension_numbers<[1], [0], [0], [1], [0, 0, 1, 1], [], []>} : vector<64x32xbf16>, vector<32x16xbf16>, vector<64x16xf32> -> vector<64x16xf32>
    %c2 = arith.constant 2 : index
    %c0_15 = arith.constant 0 : index
    %c0_16 = arith.constant 0 : index
    %c0_17 = arith.constant 0 : index
    %12 = vector.load %arg3[%c2, %c0_15, %c0_16, %c0_17] : memref<3x2x32x16xbf16, #tpu.memory_space<vmem>>, vector<1x1x32x16xbf16>
    %13 = vector.shape_cast %12 : vector<1x1x32x16xbf16> to vector<32x16xbf16>
    %cst_18 = arith.constant dense<0.000000e+00> : vector<64x16xf32>
    %14 = tpu.matmul %3, %13, %cst_18 {dimension_numbers = #tpu.dot_dimension_numbers<[1], [0], [0], [1], [0, 0, 1, 1], [], []>} : vector<64x32xbf16>, vector<32x16xbf16>, vector<64x16xf32> -> vector<64x16xf32>
    %15 = arith.truncf %8 : vector<64x16xf32> to vector<64x16xbf16>
    %16 = vector.shape_cast %15 : vector<64x16xbf16> to vector<4x16x16xbf16>
    %17 = arith.truncf %11 : vector<64x16xf32> to vector<64x16xbf16>
    %18 = vector.shape_cast %17 : vector<64x16xbf16> to vector<4x16x16xbf16>
    %19 = arith.truncf %14 : vector<64x16xf32> to vector<64x16xbf16>
    %20 = vector.shape_cast %19 : vector<64x16xbf16> to vector<4x16x16xbf16>
    "tpu.trace_start"() <{level = 10 : i32, message = "gid,gjd->gij"}> : () -> ()
    %cst_19 = arith.constant dense<0.000000e+00> : vector<4x16x16xf32>
    %21 = tpu.matmul %16, %18, %cst_19 {dimension_numbers = #tpu.dot_dimension_numbers<[2], [2], [1], [1], [0, 0, 0, 1, 1, 1], [0], [0]>} : vector<4x16x16xbf16>, vector<4x16x16xbf16>, vector<4x16x16xf32> -> vector<4x16x16xf32>
    "tpu.trace_stop"() : () -> ()
    %22 = arith.addf %21, %4 : vector<4x16x16xf32>
    %cst_20 = arith.constant dense<0xFF800000> : vector<4x16xf32>
    %23 = vector.multi_reduction <maximumf>, %22, %cst_20 [2] : vector<4x16x16xf32> to vector<4x16xf32>
    %24 = vector.shape_cast %23 : vector<4x16xf32> to vector<4x16x1xf32>
    %25 = vector.broadcast %24 : vector<4x16x1xf32> to vector<4x16x16xf32>
    %26 = arith.subf %22, %25 : vector<4x16x16xf32>
    %27 = math.exp %26 : vector<4x16x16xf32>
    %cst_21 = arith.constant dense<0.000000e+00> : vector<4x16xf32>
    %28 = vector.multi_reduction <add>, %27, %cst_21 [2] : vector<4x16x16xf32> to vector<4x16xf32>
    %29 = vector.shape_cast %28 : vector<4x16xf32> to vector<4x16x1xf32>
    %30 = tpu.reciprocal %29 {approx = true} : vector<4x16x1xf32> -> vector<4x16x1xf32>
    %31 = vector.broadcast %30 : vector<4x16x1xf32> to vector<4x16x16xf32>
    %32 = arith.mulf %27, %31 : vector<4x16x16xf32>
    %33 = arith.truncf %32 : vector<4x16x16xf32> to vector<4x16x16xbf16>
    "tpu.trace_start"() <{level = 10 : i32, message = "gij,gjd->gid"}> : () -> ()
    %cst_22 = arith.constant dense<0.000000e+00> : vector<4x16x16xf32>
    %34 = tpu.matmul %33, %20, %cst_22 {dimension_numbers = #tpu.dot_dimension_numbers<[2], [1], [1], [2], [0, 0, 0, 1, 1, 2], [0], [0]>} : vector<4x16x16xbf16>, vector<4x16x16xbf16>, vector<4x16x16xf32> -> vector<4x16x16xf32>
    "tpu.trace_stop"() : () -> ()
    %35 = vector.shape_cast %34 : vector<4x16x16xf32> to vector<64x16xf32>
    %36 = arith.truncf %35 : vector<64x16xf32> to vector<64x16xbf16>
    %c0_23 = arith.constant 0 : index
    %c0_24 = arith.constant 0 : index
    %c0_25 = arith.constant 0 : index
    %37 = vector.load %arg4[%c0_23, %c0_24, %c0_25] : memref<2x16x32xbf16, #tpu.memory_space<vmem>>, vector<1x16x32xbf16>
    %38 = vector.shape_cast %37 : vector<1x16x32xbf16> to vector<16x32xbf16>
    %cst_26 = arith.constant dense<0.000000e+00> : vector<64x32xf32>
    %39 = tpu.matmul %36, %38, %cst_26 {dimension_numbers = #tpu.dot_dimension_numbers<[1], [0], [0], [1], [0, 0, 1, 1], [], []>} : vector<64x16xbf16>, vector<16x32xbf16>, vector<64x32xf32> -> vector<64x32xf32>
    %40 = arith.addf %5, %39 : vector<64x32xf32>
    %c0_27 = arith.constant 0 : index
    %c1_28 = arith.constant 1 : index
    %c0_29 = arith.constant 0 : index
    %c0_30 = arith.constant 0 : index
    %41 = vector.load %arg3[%c0_27, %c1_28, %c0_29, %c0_30] : memref<3x2x32x16xbf16, #tpu.memory_space<vmem>>, vector<1x1x32x16xbf16>
    %42 = vector.shape_cast %41 : vector<1x1x32x16xbf16> to vector<32x16xbf16>
    %cst_31 = arith.constant dense<0.000000e+00> : vector<64x16xf32>
    %43 = tpu.matmul %3, %42, %cst_31 {dimension_numbers = #tpu.dot_dimension_numbers<[1], [0], [0], [1], [0, 0, 1, 1], [], []>} : vector<64x32xbf16>, vector<32x16xbf16>, vector<64x16xf32> -> vector<64x16xf32>
    %c1_32 = arith.constant 1 : index
    %c1_33 = arith.constant 1 : index
    %c0_34 = arith.constant 0 : index
    %c0_35 = arith.constant 0 : index
    %44 = vector.load %arg3[%c1_32, %c1_33, %c0_34, %c0_35] : memref<3x2x32x16xbf16, #tpu.memory_space<vmem>>, vector<1x1x32x16xbf16>
    %45 = vector.shape_cast %44 : vector<1x1x32x16xbf16> to vector<32x16xbf16>
    %cst_36 = arith.constant dense<0.000000e+00> : vector<64x16xf32>
    %46 = tpu.matmul %3, %45, %cst_36 {dimension_numbers = #tpu.dot_dimension_numbers<[1], [0], [0], [1], [0, 0, 1, 1], [], []>} : vector<64x32xbf16>, vector<32x16xbf16>, vector<64x16xf32> -> vector<64x16xf32>
    %c2_37 = arith.constant 2 : index
    %c1_38 = arith.constant 1 : index
    %c0_39 = arith.constant 0 : index
    %c0_40 = arith.constant 0 : index
    %47 = vector.load %arg3[%c2_37, %c1_38, %c0_39, %c0_40] : memref<3x2x32x16xbf16, #tpu.memory_space<vmem>>, vector<1x1x32x16xbf16>
    %48 = vector.shape_cast %47 : vector<1x1x32x16xbf16> to vector<32x16xbf16>
    %cst_41 = arith.constant dense<0.000000e+00> : vector<64x16xf32>
    %49 = tpu.matmul %3, %48, %cst_41 {dimension_numbers = #tpu.dot_dimension_numbers<[1], [0], [0], [1], [0, 0, 1, 1], [], []>} : vector<64x32xbf16>, vector<32x16xbf16>, vector<64x16xf32> -> vector<64x16xf32>
    %50 = arith.truncf %43 : vector<64x16xf32> to vector<64x16xbf16>
    %51 = vector.shape_cast %50 : vector<64x16xbf16> to vector<4x16x16xbf16>
    %52 = arith.truncf %46 : vector<64x16xf32> to vector<64x16xbf16>
    %53 = vector.shape_cast %52 : vector<64x16xbf16> to vector<4x16x16xbf16>
    %54 = arith.truncf %49 : vector<64x16xf32> to vector<64x16xbf16>
    %55 = vector.shape_cast %54 : vector<64x16xbf16> to vector<4x16x16xbf16>
    "tpu.trace_start"() <{level = 10 : i32, message = "gid,gjd->gij"}> : () -> ()
    %cst_42 = arith.constant dense<0.000000e+00> : vector<4x16x16xf32>
    %56 = tpu.matmul %51, %53, %cst_42 {dimension_numbers = #tpu.dot_dimension_numbers<[2], [2], [1], [1], [0, 0, 0, 1, 1, 1], [0], [0]>} : vector<4x16x16xbf16>, vector<4x16x16xbf16>, vector<4x16x16xf32> -> vector<4x16x16xf32>
    "tpu.trace_stop"() : () -> ()
    %57 = arith.addf %56, %4 : vector<4x16x16xf32>
    %cst_43 = arith.constant dense<0xFF800000> : vector<4x16xf32>
    %58 = vector.multi_reduction <maximumf>, %57, %cst_43 [2] : vector<4x16x16xf32> to vector<4x16xf32>
    %59 = vector.shape_cast %58 : vector<4x16xf32> to vector<4x16x1xf32>
    %60 = vector.broadcast %59 : vector<4x16x1xf32> to vector<4x16x16xf32>
    %61 = arith.subf %57, %60 : vector<4x16x16xf32>
    %62 = math.exp %61 : vector<4x16x16xf32>
    %cst_44 = arith.constant dense<0.000000e+00> : vector<4x16xf32>
    %63 = vector.multi_reduction <add>, %62, %cst_44 [2] : vector<4x16x16xf32> to vector<4x16xf32>
    %64 = vector.shape_cast %63 : vector<4x16xf32> to vector<4x16x1xf32>
    %65 = tpu.reciprocal %64 {approx = true} : vector<4x16x1xf32> -> vector<4x16x1xf32>
    %66 = vector.broadcast %65 : vector<4x16x1xf32> to vector<4x16x16xf32>
    %67 = arith.mulf %62, %66 : vector<4x16x16xf32>
    %68 = arith.truncf %67 : vector<4x16x16xf32> to vector<4x16x16xbf16>
    "tpu.trace_start"() <{level = 10 : i32, message = "gij,gjd->gid"}> : () -> ()
    %cst_45 = arith.constant dense<0.000000e+00> : vector<4x16x16xf32>
    %69 = tpu.matmul %68, %55, %cst_45 {dimension_numbers = #tpu.dot_dimension_numbers<[2], [1], [1], [2], [0, 0, 0, 1, 1, 2], [0], [0]>} : vector<4x16x16xbf16>, vector<4x16x16xbf16>, vector<4x16x16xf32> -> vector<4x16x16xf32>
    "tpu.trace_stop"() : () -> ()
    %70 = vector.shape_cast %69 : vector<4x16x16xf32> to vector<64x16xf32>
    %71 = arith.truncf %70 : vector<64x16xf32> to vector<64x16xbf16>
    %c1_46 = arith.constant 1 : index
    %c0_47 = arith.constant 0 : index
    %c0_48 = arith.constant 0 : index
    %72 = vector.load %arg4[%c1_46, %c0_47, %c0_48] : memref<2x16x32xbf16, #tpu.memory_space<vmem>>, vector<1x16x32xbf16>
    %73 = vector.shape_cast %72 : vector<1x16x32xbf16> to vector<16x32xbf16>
    %cst_49 = arith.constant dense<0.000000e+00> : vector<64x32xf32>
    %74 = tpu.matmul %71, %73, %cst_49 {dimension_numbers = #tpu.dot_dimension_numbers<[1], [0], [0], [1], [0, 0, 1, 1], [], []>} : vector<64x16xbf16>, vector<16x32xbf16>, vector<64x32xf32> -> vector<64x32xf32>
    %75 = arith.addf %40, %74 : vector<64x32xf32>
    %c0_50 = arith.constant 0 : index
    %c0_51 = arith.constant 0 : index
    %76 = vector.load %arg5[%c0_50, %c0_51] : memref<1x32xf32, #tpu.memory_space<vmem>>, vector<1x32xf32>
    %77 = vector.broadcast %76 : vector<1x32xf32> to vector<64x32xf32>
    %78 = arith.addf %75, %77 : vector<64x32xf32>
    %79 = vector.shape_cast %1 : vector<4x16x32xf32> to vector<64x32xf32>
    %80 = arith.addf %78, %79 : vector<64x32xf32>
    %81 = vector.shape_cast %80 : vector<64x32xf32> to vector<4x16x32xf32>
    %c0_52 = arith.constant 0 : index
    %c0_53 = arith.constant 0 : index
    %c0_54 = arith.constant 0 : index
    %c0_55 = arith.constant 0 : index
    %82 = vector.load %arg7[%c0_52, %c0_53, %c0_54, %c0_55] : memref<1x4x16x32xf32, #tpu.memory_space<vmem>>, vector<1x4x16x32xf32>
    %83 = vector.shape_cast %82 : vector<1x4x16x32xf32> to vector<4x16x32xf32>
    %84 = vector.shape_cast %81 : vector<4x16x32xf32> to vector<1x4x16x32xf32>
    tpu.vector_store %arg7[%c0_52, %c0_53, %c0_54, %c0_55], %84 {strides = array<i32>} : memref<1x4x16x32xf32, #tpu.memory_space<vmem>>, vector<1x4x16x32xf32>,
    return
  }
  func.func @transform_0(%arg0: i32, %arg1: i32) -> (i32, i32, i32, i32) {
    %c0_i32 = arith.constant 0 : i32
    %c0_i32_0 = arith.constant 0 : i32
    %c0_i32_1 = arith.constant 0 : i32
    return %arg1, %arg0, %c0_i32, %c0_i32_0 : i32, i32, i32, i32
  }
  func.func @transform_1(%arg0: i32, %arg1: i32) -> (i32, i32, i32, i32) {
    %c0_i32 = arith.constant 0 : i32
    %c0_i32_0 = arith.constant 0 : i32
    %c0_i32_1 = arith.constant 0 : i32
    %c0_i32_2 = arith.constant 0 : i32
    %c0_i32_3 = arith.constant 0 : i32
    return %c0_i32, %c0_i32_0, %c0_i32_1, %c0_i32_2 : i32, i32, i32, i32
  }
  func.func @transform_2(%arg0: i32, %arg1: i32) -> (i32, i32, i32) {
    %c0_i32 = arith.constant 0 : i32
    %c0_i32_0 = arith.constant 0 : i32
    %c0_i32_1 = arith.constant 0 : i32
    %c0_i32_2 = arith.constant 0 : i32
    return %c0_i32, %c0_i32_0, %c0_i32_1 : i32, i32, i32
  }
  func.func @transform_3(%arg0: i32, %arg1: i32) -> (i32, i32) {
    %c0_i32 = arith.constant 0 : i32
    %c0_i32_0 = arith.constant 0 : i32
    %c0_i32_1 = arith.constant 0 : i32
    return %c0_i32, %c0_i32_0 : i32, i32
  }
  func.func @transform_4(%arg0: i32, %arg1: i32) -> (i32, i32, i32) {
    %c0_i32 = arith.constant 0 : i32
    %c0_i32_0 = arith.constant 0 : i32
    %c0_i32_1 = arith.constant 0 : i32
    return %arg0, %c0_i32, %c0_i32_0 : i32, i32, i32
  }
  func.func @transform_5(%arg0: i32, %arg1: i32) -> (i32, i32, i32, i32) {
    %c0_i32 = arith.constant 0 : i32
    %c0_i32_0 = arith.constant 0 : i32
    %c0_i32_1 = arith.constant 0 : i32
    return %arg1, %arg0, %c0_i32, %c0_i32_0 : i32, i32, i32, i32
  }
}

</mosaic_0001>

<llo_original>
// kernel: residual_window_attention_forward.1
$region0: #{residual_window_attention_forward.1}
  #allocation0 [shape = 'u32[]', space=smem, size = 0x4, offset = 0x4, fixed_abs, tag = 'smem constant byte address 0x4 - core index']
  #allocation1 [shape = 'u32[144,128]{1,0:T(1,128)}', space=vmem, size = 0x12000, scoped, tag = 'internal scratch']
  %s0 = inlined_call_operand.vmem [shape: f32[2,4,16,32], index: 0, kind: input, shape index: {}, may-alias: {0,5}]
  %s1 = inlined_call_operand.vmem [shape: bf16[3,2,32,16], index: 1, kind: input, shape index: {}]
  %s2 = inlined_call_operand.vmem [shape: bf16[2,16,32], index: 2, kind: input, shape index: {}]
  %s3 = inlined_call_operand.vmem [shape: f32[1,32], index: 3, kind: input, shape index: {}]
  %s4 = inlined_call_operand.vmem [shape: f32[4,16,16], index: 4, kind: input, shape index: {}]
  %s5 = inlined_call_operand.vmem [shape: f32[2,4,16,32], index: 5, kind: output, shape index: {}, may-alias: {0,5}]
  %s6 = sld [smem:[#allocation0]]
  $region53: #{residual_window_attention_forward.1} parent=0
    _
  %s8 = ssub.s32 1, %s6
  %s9 = scalar_select 0, %s8, %s6
  loop: start=0, step=1, limit=4
  $region2: #{residual_window_attention_forward.1} parent=0 // loop_pre_header
    _
  $region3: #{residual_window_attention_forward.1} parent=0 // loop_header
    %s11 = sphi 0, %s15
    %p12 = scmp.ge.s32.totalorder %s11, 4
    %s18 = sphi 0, %s30
    %s19 = sphi 0, %s26
    %s20 = sphi 0, %s18
    %s21 = sphi 0, %s19
    %s22 = sphi 0, %s20
    %s23 = sphi 0, %s21
    %s35 = sphi 0, %s37
    %s38 = sphi 0, %s35
    %s39 = sphi 0, %s38
    %s55 = sphi 0, %s39
    %s59 = sphi 0, %s59
    %s61 = sphi 0, %s59
    %s62 = sphi 0, %s61
    %s76 = sphi 0, %s62
    %s80 = sphi 0, %s80
    %s82 = sphi 0, %s80
    %s83 = sphi 0, %s82
    %s97 = sphi 0, %s83
    %s101 = sphi 0, %s101
    %s103 = sphi 0, %s101
    %s104 = sphi 0, %s103
    %s118 = sphi 0, %s104
    %s124 = sphi 0, %s126
    %s127 = sphi 0, %s124
    %s128 = sphi 0, %s127
    %s144 = sphi 0, %s128
    %s152 = sphi 0, %s154
    %s155 = sphi 0, %s152
    %s156 = sphi 0, %s155
    %s172 = sphi 0, %s156
  $region4: #{residual_window_attention_forward.1} parent=0 // loop_header_branch
    %14 = sbr.rel (%p12) target = $region8
  $region5: #{residual_window_attention_forward.1} parent=0 // loop_body
    %s16 = ssub.s32 %s11, 1
    %s17 = ssub.s32 %s11, 2
    %s24 = sadd.s32 1, %s19
    %p25 = scmp.ge.s32.totalorder %s24, 2
    %s26 = scalar_select %p25, 0, %s24
    %s27 = sadd.s32 1, %s18
    %s28 = scalar_select %p25, %s27, %s18
    %p29 = scmp.ge.s32.totalorder %s28, 1
    %s30 = scalar_select %p29, 0, %s28
    %s31 = ssub.s32 %s19, %s26
    %s32 = ssub.s32 %s18, %s30
    %s33 = sor.u32 %s31, %s32
    %p34 = scmp.eq.s32.totalorder %s33, 0
    %s36 = sadd.s32 %s35, 1
    %s37 = scalar_select %p34, %s35, %s36
    %p40 = pneg %p34
    %p41 = scmp.eq.s32.totalorder %s11, 1
    %p42 = por %p40, %p41
    %p43 = scmp.ne.s32.totalorder %s35, %s38
    %p44 = scmp.eq.s32.totalorder %s11, 0
    %p45 = por %p43, %p44
    %p46 = scmp.ne.s32.totalorder %s35, %s38
    %p47 = scmp.eq.s32.totalorder %s16, 1
    %p48 = por %p46, %p47
    %p49 = scmp.ne.s32.totalorder %s38, %s39
    %p50 = scmp.eq.s32.totalorder %s16, 0
    %p51 = por %p49, %p50
    %p52 = scmp.ne.s32.totalorder %s38, %s39
    %p53 = scmp.eq.s32.totalorder %s17, 1
    %p54 = por %p52, %p53
    %p56 = scmp.ne.s32.totalorder %s39, %s55
    %p57 = scmp.eq.s32.totalorder %s17, 0
    %p58 = por %p56, %p57
    %s60 = sadd.s32 %s59, 1
    %p63 = scmp.eq.s32.totalorder %s11, 1
    %p64 = scmp.ne.s32.totalorder %s59, %s61
    %p65 = scmp.eq.s32.totalorder %s11, 0
    %p66 = por %p64, %p65
    %p67 = scmp.ne.s32.totalorder %s59, %s61
    %p68 = scmp.eq.s32.totalorder %s16, 1
    %p69 = por %p67, %p68
    %p70 = scmp.ne.s32.totalorder %s61, %s62
    %p71 = scmp.eq.s32.totalorder %s16, 0
    %p72 = por %p70, %p71
    %p73 = scmp.ne.s32.totalorder %s61, %s62
    %p74 = scmp.eq.s32.totalorder %s17, 1
    %p75 = por %p73, %p74
    %p77 = scmp.ne.s32.totalorder %s62, %s76
    %p78 = scmp.eq.s32.totalorder %s17, 0
    %p79 = por %p77, %p78
    %s81 = sadd.s32 %s80, 1
    %p84 = scmp.eq.s32.totalorder %s11, 1
    %p85 = scmp.ne.s32.totalorder %s80, %s82
    %p86 = scmp.eq.s32.totalorder %s11, 0
    %p87 = por %p85, %p86
    %p88 = scmp.ne.s32.totalorder %s80, %s82
    %p89 = scmp.eq.s32.totalorder %s16, 1
    %p90 = por %p88, %p89
    %p91 = scmp.ne.s32.totalorder %s82, %s83
    %p92 = scmp.eq.s32.totalorder %s16, 0
    %p93 = por %p91, %p92
    %p94 = scmp.ne.s32.totalorder %s82, %s83
    %p95 = scmp.eq.s32.totalorder %s17, 1
    %p96 = por %p94, %p95
    %p98 = scmp.ne.s32.totalorder %s83, %s97
    %p99 = scmp.eq.s32.totalorder %s17, 0
    %p100 = por %p98, %p99
    %s102 = sadd.s32 %s101, 1
    %p105 = scmp.eq.s32.totalorder %s11, 1
    %p106 = scmp.ne.s32.totalorder %s101, %s103
    %p107 = scmp.eq.s32.totalorder %s11, 0
    %p108 = por %p106, %p107
    %p109 = scmp.ne.s32.totalorder %s101, %s103
    %p110 = scmp.eq.s32.totalorder %s16, 1
    %p111 = por %p109, %p110
    %p112 = scmp.ne.s32.totalorder %s103, %s104
    %p113 = scmp.eq.s32.totalorder %s16, 0
    %p114 = por %p112, %p113
    %p115 = scmp.ne.s32.totalorder %s103, %s104
    %p116 = scmp.eq.s32.totalorder %s17, 1
    %p117 = por %p115, %p116
    %p119 = scmp.ne.s32.totalorder %s104, %s118
    %p120 = scmp.eq.s32.totalorder %s17, 0
    %p121 = por %p119, %p120
    %s122 = ssub.s32 %s18, %s30
    %p123 = scmp.eq.s32.totalorder %s122, 0
    %s125 = sadd.s32 %s124, 1
    %s126 = scalar_select %p123, %s124, %s125
    %p129 = pneg %p123
    %p130 = scmp.eq.s32.totalorder %s11, 1
    %p131 = por %p129, %p130
    %p132 = scmp.ne.s32.totalorder %s124, %s127
    %p133 = scmp.eq.s32.totalorder %s11, 0
    %p134 = por %p132, %p133
    %p135 = scmp.ne.s32.totalorder %s124, %s127
    %p136 = scmp.eq.s32.totalorder %s16, 1
    %p137 = por %p135, %p136
    %p138 = scmp.ne.s32.totalorder %s127, %s128
    %p139 = scmp.eq.s32.totalorder %s16, 0
    %p140 = por %p138, %p139
    %p141 = scmp.ne.s32.totalorder %s127, %s128
    %p142 = scmp.eq.s32.totalorder %s17, 1
    %p143 = por %p141, %p142
    %p145 = scmp.ne.s32.totalorder %s128, %s144
    %p146 = scmp.eq.s32.totalorder %s17, 0
    %p147 = por %p145, %p146
    %s148 = ssub.s32 %s19, %s26
    %s149 = ssub.s32 %s18, %s30
    %s150 = sor.u32 %s148, %s149
    %p151 = scmp.eq.s32.totalorder %s150, 0
    %s153 = sadd.s32 %s152, 1
    %s154 = scalar_select %p151, %s152, %s153
    %p157 = pneg %p151
    %p158 = scmp.eq.s32.totalorder %s11, 1
    %p159 = por %p157, %p158
    %p160 = scmp.ne.s32.totalorder %s152, %s155
    %p161 = scmp.eq.s32.totalorder %s11, 0
    %p162 = por %p160, %p161
    %p163 = scmp.ne.s32.totalorder %s152, %s155
    %p164 = scmp.eq.s32.totalorder %s16, 1
    %p165 = por %p163, %p164
    %p166 = scmp.ne.s32.totalorder %s155, %s156
    %p167 = scmp.eq.s32.totalorder %s16, 0
    %p168 = por %p166, %p167
    %p169 = scmp.ne.s32.totalorder %s155, %s156
    %p170 = scmp.eq.s32.totalorder %s17, 1
    %p171 = por %p169, %p170
    %p173 = scmp.ne.s32.totalorder %s156, %s172
    %p174 = scmp.eq.s32.totalorder %s17, 0
    %p175 = por %p173, %p174
    %p176 = scmp.le.s32.totalorder 1, %s11
    %p177 = scmp.lt.s32.totalorder %s11, 3
    %p178 = pnand %p176, %p177
    %p179 = pneg %p178
    // Predicated region
    $region9: #{residual_window_attention_forward.1} parent=5 // pred_check
      _
    $region10: #{residual_window_attention_forward.1} parent=5 // pred_check_branch
      %181 = sbr.rel (%p178) target = $region12
    $region11: #{residual_window_attention_forward.1} parent=5 // pred_region
      %s182 = ssub.s32 %s11, 1
      // Predicated region
      $region13: #{residual_window_attention_forward.1} parent=11 // pred_check
        %p183 = pneg %p72
      $region14: #{residual_window_attention_forward.1} parent=11 // pred_check_branch
        %185 = sbr.rel (%p183) target = $region16
      $region15: #{residual_window_attention_forward.1} parent=11 // pred_region
        _
      $region16: #{residual_window_attention_forward.1} parent=11 // pred_fallthru
        _
      // Predicated region
      $region17: #{residual_window_attention_forward.1} parent=11 // pred_check
        %p186 = pneg %p93
      $region18: #{residual_window_attention_forward.1} parent=11 // pred_check_branch
        %188 = sbr.rel (%p186) target = $region20
      $region19: #{residual_window_attention_forward.1} parent=11 // pred_region
        _
      $region20: #{residual_window_attention_forward.1} parent=11 // pred_fallthru
        _
      // Predicated region
      $region21: #{residual_window_attention_forward.1} parent=11 // pred_check
        %p189 = pneg %p114
      $region22: #{residual_window_attention_forward.1} parent=11 // pred_check_branch
        %191 = sbr.rel (%p189) target = $region24
      $region23: #{residual_window_attention_forward.1} parent=11 // pred_region
        _
      $region24: #{residual_window_attention_forward.1} parent=11 // pred_fallthru
        _
      // Predicated region
      $region25: #{residual_window_attention_forward.1} parent=11 // pred_check
        %p192 = pneg %p140
      $region26: #{residual_window_attention_forward.1} parent=11 // pred_check_branch
        %194 = sbr.rel (%p192) target = $region28
      $region27: #{residual_window_attention_forward.1} parent=11 // pred_region
        %s195 = smul.u32 4, %s20
        %p196 = scmp.lt.s32.totalorder %s195, 3
        %s197 = scalar_select %p196, %s195, 3
        %s198 = smul.addr %s197, 2
        %s199 = smul.addr %s198, 8
        %s200 = scalar_lea.vmem %s4, %s199
        %s201 = smul.u32 4, %s20
      $region28: #{residual_window_attention_forward.1} parent=11 // pred_fallthru
        _
    $region12: #{residual_window_attention_forward.1} parent=5 // pred_fallthru
      _
    %p202 = scmp.lt.s32.totalorder %s11, 2
    // Predicated region
    $region29: #{residual_window_attention_forward.1} parent=5 // pred_check
      %p203 = pneg %p202
    $region30: #{residual_window_attention_forward.1} parent=5 // pred_check_branch
      %205 = sbr.rel (%p203) target = $region32
    $region31: #{residual_window_attention_forward.1} parent=5 // pred_region
      // Predicated region
      $region33: #{residual_window_attention_forward.1} parent=31 // pred_check
        %p206 = pneg %p45
      $region34: #{residual_window_attention_forward.1} parent=31 // pred_check_branch
        %208 = sbr.rel (%p206) target = $region36
      $region35: #{residual_window_attention_forward.1} parent=31 // pred_region
        %s209 = smul.u32 4, %s18
        %p210 = scmp.lt.s32.totalorder %s19, 1
        %s211 = scalar_select %p210, %s19, 1
        %p212 = scmp.lt.s32.totalorder %s209, 3
        %s213 = scalar_select %p212, %s209, 3
        %s214 = smul.addr %s213, 2
        %s215 = smul.addr %s211, 8
        %s216 = sadd.s32 %s214, %s215
        %s217 = smul.addr %s216, 8
        %s218 = scalar_lea.vmem %s0, %s217
        %s219 = smul.u32 4, %s18
      $region36: #{residual_window_attention_forward.1} parent=31 // pred_fallthru
        _
    $region32: #{residual_window_attention_forward.1} parent=5 // pred_fallthru
      _
    %p220 = scmp.le.s32.totalorder 1, %s11
    %p221 = scmp.lt.s32.totalorder %s11, 3
    %p222 = pnand %p220, %p221
    %p223 = pneg %p222
    // Predicated region
    $region37: #{residual_window_attention_forward.1} parent=5 // pred_check
      _
    $region38: #{residual_window_attention_forward.1} parent=5 // pred_check_branch
      %225 = sbr.rel (%p222) target = $region40
    $region39: #{residual_window_attention_forward.1} parent=5 // pred_region
      %s226 = ssub.s32 %s11, 1
      %s227 = smul.u32 4, %s20
      %p228 = scmp.lt.s32.totalorder %s21, 1
      %s229 = scalar_select %p228, %s21, 1
      %p230 = scmp.lt.s32.totalorder %s227, 3
      %s231 = scalar_select %p230, %s227, 3
      %s232 = smul.addr %s231, 2
      %s233 = smul.addr %s229, 8
      %s234 = sadd.s32 %s232, %s233
      %s235 = smul.addr %s234, 8
      %s236 = scalar_lea.vmem %s0, %s235
      %p237 = pneg %p51
      %p238 = pneg %p48
      %p239 = pneg %p72
      %p240 = pneg %p69
      %p241 = pneg %p93
      %p242 = pneg %p90
      %p243 = pneg %p114
      %p244 = pneg %p111
      %s245 = smul.u32 4, %s20
      %p246 = scmp.lt.s32.totalorder %s245, 3
      %s247 = scalar_select %p246, %s245, 3
      %s248 = smul.addr %s247, 2
      %s249 = smul.addr %s248, 8
      %s250 = scalar_lea.vmem %s4, %s249
      %p251 = pneg %p140
      %p252 = pneg %p137
      %p253 = pneg %p168
      %p254 = pneg %p165
      %s255 = smul.u32 4, %s20
      %p256 = scmp.lt.s32.totalorder %s21, 1
      %s257 = scalar_select %p256, %s21, 1
      %p258 = scmp.lt.s32.totalorder %s255, 3
      %s259 = scalar_select %p258, %s255, 3
      %s260 = smul.addr %s259, 2
      %s261 = smul.addr %s257, 8
      %s262 = sadd.s32 %s260, %s261
      %s263 = smul.addr %s262, 8
      %s264 = scalar_lea.vmem %s5, %s263
      %s265 = smul.u32 4, %s20
      %p266 = scmp.lt.s32.totalorder %s21, 1
      %s267 = scalar_select %p266, %s21, 1
      %p268 = scmp.lt.s32.totalorder %s265, 3
      %s269 = scalar_select %p268, %s265, 3
      %s270 = smul.addr %s269, 2
      %s271 = smul.addr %s267, 8
      %s272 = sadd.s32 %s270, %s271
      %s273 = smul.addr %s272, 8
      %s274 = scalar_lea.vmem %s0, %s273
      %s275 = smul.u32 4, %s20
      %s276 = smul.u32 4, %s20
      %p277 = scmp.lt.s32.totalorder %s276, 3
      %s278 = scalar_select %p277, %s276, 3
      %s279 = smul.addr %s278, 2
      %s280 = smul.addr %s279, 8
      %s281 = scalar_lea.vmem %s4, %s280
      %s282 = smul.u32 4, %s20
      %s283 = smul.u32 4, %s20
      %p284 = scmp.lt.s32.totalorder %s21, 1
      %s285 = scalar_select %p284, %s21, 1
      %p286 = scmp.lt.s32.totalorder %s283, 3
      %s287 = scalar_select %p286, %s283, 3
      %s288 = smul.addr %s287, 2
      %s289 = smul.addr %s285, 8
      %s290 = sadd.s32 %s288, %s289
      %s291 = smul.addr %s290, 8
      %s292 = scalar_lea.vmem %s5, %s291
      %s293 = smul.u32 4, %s20
      %v295 = vld [vmem:[%s274] sm:$0xff]
      %v296 = vld [vmem:[%s274 + $0x8] sm:$0xff]
      %v297 = vld [vmem:[%s274 + $0x10] sm:$0xff]
      %v298 = vld [vmem:[%s274 + $0x18] sm:$0xff]
      %v299 = vld [vmem:[%s274 + $0x20] sm:$0xff]
      %v300 = vld [vmem:[%s274 + $0x28] sm:$0xff]
      %v301 = vld [vmem:[%s274 + $0x30] sm:$0xff]
      %v302 = vld [vmem:[%s274 + $0x38] sm:$0xff]
      %v303 = vpack.c.bf16 %v296, %v295
      %v304 = vpack.c.bf16 %v298, %v297
      %v305 = vpack.c.bf16 %v300, %v299
      %v306 = vpack.c.bf16 %v302, %v301
      %v307 = vld [vmem:[%s281] sm:$0xff]
      %v308 = vld [vmem:[%s281 + $0x8] sm:$0xff]
      %v309 = vld [vmem:[%s281 + $0x10] sm:$0xff]
      %v310 = vld [vmem:[%s281 + $0x18] sm:$0xff]
      %v311 = vld [vmem:[%s281 + $0x20] sm:$0xff]
      %v312 = vld [vmem:[%s281 + $0x28] sm:$0xff]
      %v313 = vld [vmem:[%s281 + $0x30] sm:$0xff]
      %v314 = vld [vmem:[%s281 + $0x38] sm:$0xff]
      %v315 = vld [vmem:[%s1] sm:$0xf]
      %v316 = vld [vmem:[%s1 + $0x4] sm:$0xf]
      %v317 = vld [vmem:[%s1 + $0x8] sm:$0xf]
      %v318 = vld [vmem:[%s1 + $0xc] sm:$0xf]
      %v323 = vunpack.c.l.b16 %v315
      %v324 = vunpack.c.l.b16 %v316
      %v325 = vunpack.c.l.b16 %v317
      %v326 = vunpack.c.l.b16 %v318
      %v327 = vpack.c.b16 %v324, %v323
      %v328 = vpack.c.b16 %v326, %v325
      %vm331 = vcmask 261120
      %v333 = vsel %vm331, %v303, 0
      %v336 = vsel %vm331, %v304, 0
      %v339 = vsel %vm331, %v305, 0
      %v342 = vsel %vm331, %v306, 0
      %344 = vmatprep.subr.bf16.mxu0 0
      %345 = vmatpush1.bf16.msra.mxu0 0
      %346 = vmatprep.subr.bf16.mxu0 0
      %347 = vmatpush1.bf16.msra.mxu0 0
      %348 = vmatprep.subr.bf16.mxu0 0
      %349 = vmatpush1.bf16.msra.mxu0 0
      %350 = vmatprep.subr.bf16.mxu0 0
      %351 = vmatpush1.bf16.msra.mxu0 0
      %352 = vmatprep.subr.bf16.mxu0 0
      %353 = vmatpush1.bf16.msra.mxu0 0
      %354 = vmatprep.subr.bf16.mxu0 0
      %355 = vmatpush1.bf16.msra.mxu0 0
      %356 = vmatprep.subr.bf16.mxu0 0
      %357 = vmatpush1.bf16.msra.mxu0 %v328
      %358 = vmatprep.subr.bf16.mxu0 0
      %359 = vmatpush1.bf16.msra.mxu0 %v327
      %360 = vmatprep.subr.bf16.mxu0 0
      %361 = vmatpush2.bf16.msra.mxu0 0
      %362 = vmatprep.subr.bf16.mxu0 0
      %363 = vmatpush2.bf16.msra.mxu0 0
      %364 = vmatprep.subr.bf16.mxu0 0
      %365 = vmatpush2.bf16.msra.mxu0 0
      %366 = vmatprep.subr.bf16.mxu0 0
      %367 = vmatpush2.bf16.msra.mxu0 0
      %368 = vmatprep.subr.bf16.mxu0 0
      %369 = vmatpush2.bf16.msra.mxu0 0
      %370 = vmatprep.subr.bf16.mxu0 0
      %371 = vmatpush2.bf16.msra.mxu0 0
      %372 = vmatprep.subr.bf16.mxu0 0
      %373 = vmatpush2.bf16.msra.mxu0 0
      %374 = vmatprep.subr.bf16.mxu0 0
      %375 = vmatpush2.bf16.msra.mxu0 0
      %376 = vmatprep.mubr.bf16.mxu0 0
      %377 = vmatmul.mubr.bf16.gmra.mxu0 %v333
      %v378 = vpop.f32.mrf.mxu0
      %v379 = vadd.f32 0.0, %v378
      %v380 = vpop.f32.mrf.mxu0
      %v381 = vpop.f32.mrf.mxu0
      %v382 = vadd.f32 0.0, %v381
      %v383 = vpop.f32.mrf.mxu0
      %384 = vmatprep.mubr.bf16.mxu0 0
      %385 = vmatmul.mubr.bf16.gmra.mxu0 %v336
      %v386 = vpop.f32.mrf.mxu0
      %v387 = vadd.f32 0.0, %v386
      %v388 = vpop.f32.mrf.mxu0
      %v389 = vpop.f32.mrf.mxu0
      %v390 = vadd.f32 0.0, %v389
      %v391 = vpop.f32.mrf.mxu0
      %392 = vmatprep.mubr.bf16.mxu0 0
      %393 = vmatmul.mubr.bf16.gmra.mxu0 %v339
      %v394 = vpop.f32.mrf.mxu0
      %v395 = vadd.f32 0.0, %v394
      %v396 = vpop.f32.mrf.mxu0
      %v397 = vpop.f32.mrf.mxu0
      %v398 = vadd.f32 0.0, %v397
      %v399 = vpop.f32.mrf.mxu0
      %400 = vmatprep.mubr.bf16.mxu0 0
      %401 = vmatmul.mubr.bf16.gmra.mxu0 %v342
      %v402 = vpop.f32.mrf.mxu0
      %v403 = vadd.f32 0.0, %v402
      %v404 = vpop.f32.mrf.mxu0
      %v405 = vpop.f32.mrf.mxu0
      %v406 = vadd.f32 0.0, %v405
      %v407 = vpop.f32.mrf.mxu0
      %408 = vdwg.mxu0
      %s409 = scalar_lea.vmem %s1, 32
      %v410 = vld [vmem:[%s409] sm:$0xf]
      %v411 = vld [vmem:[%s409 + $0x4] sm:$0xf]
      %v412 = vld [vmem:[%s409 + $0x8] sm:$0xf]
      %v413 = vld [vmem:[%s409 + $0xc] sm:$0xf]
      %v418 = vunpack.c.l.b16 %v410
      %v419 = vunpack.c.l.b16 %v411
      %v420 = vunpack.c.l.b16 %v412
      %v421 = vunpack.c.l.b16 %v413
      %v422 = vpack.c.b16 %v419, %v418
      %v423 = vpack.c.b16 %v421, %v420
      %426 = vmatprep.subr.bf16.mxu0 0
      %427 = vmatpush1.bf16.msra.mxu0 0
      %428 = vmatprep.subr.bf16.mxu0 0
      %429 = vmatpush1.bf16.msra.mxu0 0
      %430 = vmatprep.subr.bf16.mxu0 0
      %431 = vmatpush1.bf16.msra.mxu0 0
      %432 = vmatprep.subr.bf16.mxu0 0
      %433 = vmatpush1.bf16.msra.mxu0 0
      %434 = vmatprep.subr.bf16.mxu0 0
      %435 = vmatpush1.bf16.msra.mxu0 0
      %436 = vmatprep.subr.bf16.mxu0 0
      %437 = vmatpush1.bf16.msra.mxu0 0
      %438 = vmatprep.subr.bf16.mxu0 0
      %439 = vmatpush1.bf16.msra.mxu0 %v423
      %440 = vmatprep.subr.bf16.mxu0 0
      %441 = vmatpush1.bf16.msra.mxu0 %v422
      %442 = vmatprep.subr.bf16.mxu0 0
      %443 = vmatpush2.bf16.msra.mxu0 0
      %444 = vmatprep.subr.bf16.mxu0 0
      %445 = vmatpush2.bf16.msra.mxu0 0
      %446 = vmatprep.subr.bf16.mxu0 0
      %447 = vmatpush2.bf16.msra.mxu0 0
      %448 = vmatprep.subr.bf16.mxu0 0
      %449 = vmatpush2.bf16.msra.mxu0 0
      %450 = vmatprep.subr.bf16.mxu0 0
      %451 = vmatpush2.bf16.msra.mxu0 0
      %452 = vmatprep.subr.bf16.mxu0 0
      %453 = vmatpush2.bf16.msra.mxu0 0
      %454 = vmatprep.subr.bf16.mxu0 0
      %455 = vmatpush2.bf16.msra.mxu0 0
      %456 = vmatprep.subr.bf16.mxu0 0
      %457 = vmatpush2.bf16.msra.mxu0 0
      %458 = vmatprep.mubr.bf16.mxu0 0
      %459 = vmatmul.mubr.bf16.gmra.mxu0 %v333
      %v460 = vpop.f32.mrf.mxu0
      %v461 = vadd.f32 0.0, %v460
      %v462 = vpop.f32.mrf.mxu0
      %v463 = vpop.f32.mrf.mxu0
      %v464 = vadd.f32 0.0, %v463
      %v465 = vpop.f32.mrf.mxu0
      %466 = vmatprep.mubr.bf16.mxu0 0
      %467 = vmatmul.mubr.bf16.gmra.mxu0 %v336
      %v468 = vpop.f32.mrf.mxu0
      %v469 = vadd.f32 0.0, %v468
      %v470 = vpop.f32.mrf.mxu0
      %v471 = vpop.f32.mrf.mxu0
      %v472 = vadd.f32 0.0, %v471
      %v473 = vpop.f32.mrf.mxu0
      %474 = vmatprep.mubr.bf16.mxu0 0
      %475 = vmatmul.mubr.bf16.gmra.mxu0 %v339
      %v476 = vpop.f32.mrf.mxu0
      %v477 = vadd.f32 0.0, %v476
      %v478 = vpop.f32.mrf.mxu0
      %v479 = vpop.f32.mrf.mxu0
      %v480 = vadd.f32 0.0, %v479
      %v481 = vpop.f32.mrf.mxu0
      %482 = vmatprep.mubr.bf16.mxu0 0
      %483 = vmatmul.mubr.bf16.gmra.mxu0 %v342
      %v484 = vpop.f32.mrf.mxu0
      %v485 = vadd.f32 0.0, %v484
      %v486 = vpop.f32.mrf.mxu0
      %v487 = vpop.f32.mrf.mxu0
      %v488 = vadd.f32 0.0, %v487
      %v489 = vpop.f32.mrf.mxu0
      %490 = vdwg.mxu0
      %s491 = scalar_lea.vmem %s1, 64
      %v492 = vld [vmem:[%s491] sm:$0xf]
      %v493 = vld [vmem:[%s491 + $0x4] sm:$0xf]
      %v494 = vld [vmem:[%s491 + $0x8] sm:$0xf]
      %v495 = vld [vmem:[%s491 + $0xc] sm:$0xf]
      %v500 = vunpack.c.l.b16 %v492
      %v501 = vunpack.c.l.b16 %v493
      %v502 = vunpack.c.l.b16 %v494
      %v503 = vunpack.c.l.b16 %v495
      %v504 = vpack.c.b16 %v501, %v500
      %v505 = vpack.c.b16 %v503, %v502
      %508 = vmatprep.subr.bf16.mxu0 0
      %509 = vmatpush1.bf16.msra.mxu0 0
      %510 = vmatprep.subr.bf16.mxu0 0
      %511 = vmatpush1.bf16.msra.mxu0 0
      %512 = vmatprep.subr.bf16.mxu0 0
      %513 = vmatpush1.bf16.msra.mxu0 0
      %514 = vmatprep.subr.bf16.mxu0 0
      %515 = vmatpush1.bf16.msra.mxu0 0
      %516 = vmatprep.subr.bf16.mxu0 0
      %517 = vmatpush1.bf16.msra.mxu0 0
      %518 = vmatprep.subr.bf16.mxu0 0
      %519 = vmatpush1.bf16.msra.mxu0 0
      %520 = vmatprep.subr.bf16.mxu0 0
      %521 = vmatpush1.bf16.msra.mxu0 %v505
      %522 = vmatprep.subr.bf16.mxu0 0
      %523 = vmatpush1.bf16.msra.mxu0 %v504
      %524 = vmatprep.subr.bf16.mxu0 0
      %525 = vmatpush2.bf16.msra.mxu0 0
      %526 = vmatprep.subr.bf16.mxu0 0
      %527 = vmatpush2.bf16.msra.mxu0 0
      %528 = vmatprep.subr.bf16.mxu0 0
      %529 = vmatpush2.bf16.msra.mxu0 0
      %530 = vmatprep.subr.bf16.mxu0 0
      %531 = vmatpush2.bf16.msra.mxu0 0
      %532 = vmatprep.subr.bf16.mxu0 0
      %533 = vmatpush2.bf16.msra.mxu0 0
      %534 = vmatprep.subr.bf16.mxu0 0
      %535 = vmatpush2.bf16.msra.mxu0 0
      %536 = vmatprep.subr.bf16.mxu0 0
      %537 = vmatpush2.bf16.msra.mxu0 0
      %538 = vmatprep.subr.bf16.mxu0 0
      %539 = vmatpush2.bf16.msra.mxu0 0
      %540 = vmatprep.mubr.bf16.mxu0 0
      %541 = vmatmul.mubr.bf16.gmra.mxu0 %v333
      %v542 = vpop.f32.mrf.mxu0
      %v543 = vadd.f32 0.0, %v542
      %v544 = vpop.f32.mrf.mxu0
      %v545 = vpop.f32.mrf.mxu0
      %v546 = vadd.f32 0.0, %v545
      %v547 = vpop.f32.mrf.mxu0
      %548 = vmatprep.mubr.bf16.mxu0 0
      %549 = vmatmul.mubr.bf16.gmra.mxu0 %v336
      %v550 = vpop.f32.mrf.mxu0
      %v551 = vadd.f32 0.0, %v550
      %v552 = vpop.f32.mrf.mxu0
      %v553 = vpop.f32.mrf.mxu0
      %v554 = vadd.f32 0.0, %v553
      %v555 = vpop.f32.mrf.mxu0
      %556 = vmatprep.mubr.bf16.mxu0 0
      %557 = vmatmul.mubr.bf16.gmra.mxu0 %v339
      %v558 = vpop.f32.mrf.mxu0
      %v559 = vadd.f32 0.0, %v558
      %v560 = vpop.f32.mrf.mxu0
      %v561 = vpop.f32.mrf.mxu0
      %v562 = vadd.f32 0.0, %v561
      %v563 = vpop.f32.mrf.mxu0
      %564 = vmatprep.mubr.bf16.mxu0 0
      %565 = vmatmul.mubr.bf16.gmra.mxu0 %v342
      %v566 = vpop.f32.mrf.mxu0
      %v567 = vadd.f32 0.0, %v566
      %v568 = vpop.f32.mrf.mxu0
      %v569 = vpop.f32.mrf.mxu0
      %v570 = vadd.f32 0.0, %v569
      %v571 = vpop.f32.mrf.mxu0
      %572 = vdwg.mxu0
      %v573 = vpack.c.bf16 %v382, %v379
      %v574 = vpack.c.bf16 %v390, %v387
      %v575 = vpack.c.bf16 %v398, %v395
      %v576 = vpack.c.bf16 %v406, %v403
      %v577 = vpack.c.bf16 %v464, %v461
      %v578 = vpack.c.bf16 %v472, %v469
      %v579 = vpack.c.bf16 %v480, %v477
      %v580 = vpack.c.bf16 %v488, %v485
      %v581 = vpack.c.bf16 %v546, %v543
      %v582 = vpack.c.bf16 %v554, %v551
      %v583 = vpack.c.bf16 %v562, %v559
      %v584 = vpack.c.bf16 %v570, %v567
      %vm585 = vcmask 130048
      %v587 = vsel %vm585, %v573, 0
      %v590 = vsel %vm585, %v577, 0
      %592 = vmatprep.subr.bf16.mxu0 0
      %593 = vmatpush1.bf16.xpose.msra.mxu0 0
      %594 = vmatprep.subr.bf16.mxu0 0
      %595 = vmatpush1.bf16.xpose.msra.mxu0 0
      %596 = vmatprep.subr.bf16.mxu0 0
      %597 = vmatpush1.bf16.xpose.msra.mxu0 0
      %598 = vmatprep.subr.bf16.mxu0 0
      %599 = vmatpush1.bf16.xpose.msra.mxu0 0
      %600 = vmatprep.subr.bf16.mxu0 0
      %601 = vmatpush1.bf16.xpose.msra.mxu0 0
      %602 = vmatprep.subr.bf16.mxu0 0
      %603 = vmatpush1.bf16.xpose.msra.mxu0 0
      %604 = vmatprep.subr.bf16.mxu0 0
      %605 = vmatpush1.bf16.xpose.msra.mxu0 0
      %606 = vmatprep.subr.bf16.mxu0 0
      %607 = vmatpush1.bf16.xpose.msra.mxu0 %v590
      %608 = vmatprep.subr.bf16.mxu0 0
      %609 = vmatpush2.bf16.xpose.msra.mxu0 0
      %610 = vmatprep.subr.bf16.mxu0 0
      %611 = vmatpush2.bf16.xpose.msra.mxu0 0
      %612 = vmatprep.subr.bf16.mxu0 0
      %613 = vmatpush2.bf16.xpose.msra.mxu0 0
      %614 = vmatprep.subr.bf16.mxu0 0
      %615 = vmatpush2.bf16.xpose.msra.mxu0 0
      %616 = vmatprep.subr.bf16.mxu0 0
      %617 = vmatpush2.bf16.xpose.msra.mxu0 0
      %618 = vmatprep.subr.bf16.mxu0 0
      %619 = vmatpush2.bf16.xpose.msra.mxu0 0
      %620 = vmatprep.subr.bf16.mxu0 0
      %621 = vmatpush2.bf16.xpose.msra.mxu0 0
      %622 = vmatprep.subr.bf16.mxu0 0
      %623 = vmatpush2.bf16.xpose.msra.mxu0 0
      %624 = vmatprep.mubr.bf16.mxu0 0
      %625 = vmatmul.mubr.bf16.gmra.mxu0 %v587
      %v626 = vpop.f32.mrf.mxu0
      %v627 = vadd.f32 %v307, %v626
      %v628 = vpop.f32.mrf.mxu0
      %v629 = vpop.f32.mrf.mxu0
      %v630 = vadd.f32 %v308, %v629
      %v631 = vpop.f32.mrf.mxu0
      %632 = vdwg.mxu0
      %v634 = vsel %vm585, %v574, 0
      %v637 = vsel %vm585, %v578, 0
      %639 = vmatprep.subr.bf16.mxu0 0
      %640 = vmatpush1.bf16.xpose.msra.mxu0 0
      %641 = vmatprep.subr.bf16.mxu0 0
      %642 = vmatpush1.bf16.xpose.msra.mxu0 0
      %643 = vmatprep.subr.bf16.mxu0 0
      %644 = vmatpush1.bf16.xpose.msra.mxu0 0
      %645 = vmatprep.subr.bf16.mxu0 0
      %646 = vmatpush1.bf16.xpose.msra.mxu0 0
      %647 = vmatprep.subr.bf16.mxu0 0
      %648 = vmatpush1.bf16.xpose.msra.mxu0 0
      %649 = vmatprep.subr.bf16.mxu0 0
      %650 = vmatpush1.bf16.xpose.msra.mxu0 0
      %651 = vmatprep.subr.bf16.mxu0 0
      %652 = vmatpush1.bf16.xpose.msra.mxu0 0
      %653 = vmatprep.subr.bf16.mxu0 0
      %654 = vmatpush1.bf16.xpose.msra.mxu0 %v637
      %655 = vmatprep.subr.bf16.mxu0 0
      %656 = vmatpush2.bf16.xpose.msra.mxu0 0
      %657 = vmatprep.subr.bf16.mxu0 0
      %658 = vmatpush2.bf16.xpose.msra.mxu0 0
      %659 = vmatprep.subr.bf16.mxu0 0
      %660 = vmatpush2.bf16.xpose.msra.mxu0 0
      %661 = vmatprep.subr.bf16.mxu0 0
      %662 = vmatpush2.bf16.xpose.msra.mxu0 0
      %663 = vmatprep.subr.bf16.mxu0 0
      %664 = vmatpush2.bf16.xpose.msra.mxu0 0
      %665 = vmatprep.subr.bf16.mxu0 0
      %666 = vmatpush2.bf16.xpose.msra.mxu0 0
      %667 = vmatprep.subr.bf16.mxu0 0
      %668 = vmatpush2.bf16.xpose.msra.mxu0 0
      %669 = vmatprep.subr.bf16.mxu0 0
      %670 = vmatpush2.bf16.xpose.msra.mxu0 0
      %671 = vmatprep.mubr.bf16.mxu0 0
      %672 = vmatmul.mubr.bf16.gmra.mxu0 %v634
      %v673 = vpop.f32.mrf.mxu0
      %v674 = vadd.f32 %v309, %v673
      %v675 = vpop.f32.mrf.mxu0
      %v676 = vpop.f32.mrf.mxu0
      %v677 = vadd.f32 %v310, %v676
      %v678 = vpop.f32.mrf.mxu0
      %679 = vdwg.mxu0
      %v681 = vsel %vm585, %v575, 0
      %v684 = vsel %vm585, %v579, 0
      %686 = vmatprep.subr.bf16.mxu0 0
      %687 = vmatpush1.bf16.xpose.msra.mxu0 0
      %688 = vmatprep.subr.bf16.mxu0 0
      %689 = vmatpush1.bf16.xpose.msra.mxu0 0
      %690 = vmatprep.subr.bf16.mxu0 0
      %691 = vmatpush1.bf16.xpose.msra.mxu0 0
      %692 = vmatprep.subr.bf16.mxu0 0
      %693 = vmatpush1.bf16.xpose.msra.mxu0 0
      %694 = vmatprep.subr.bf16.mxu0 0
      %695 = vmatpush1.bf16.xpose.msra.mxu0 0
      %696 = vmatprep.subr.bf16.mxu0 0
      %697 = vmatpush1.bf16.xpose.msra.mxu0 0
      %698 = vmatprep.subr.bf16.mxu0 0
      %699 = vmatpush1.bf16.xpose.msra.mxu0 0
      %700 = vmatprep.subr.bf16.mxu0 0
      %701 = vmatpush1.bf16.xpose.msra.mxu0 %v684
      %702 = vmatprep.subr.bf16.mxu0 0
      %703 = vmatpush2.bf16.xpose.msra.mxu0 0
      %704 = vmatprep.subr.bf16.mxu0 0
      %705 = vmatpush2.bf16.xpose.msra.mxu0 0
      %706 = vmatprep.subr.bf16.mxu0 0
      %707 = vmatpush2.bf16.xpose.msra.mxu0 0
      %708 = vmatprep.subr.bf16.mxu0 0
      %709 = vmatpush2.bf16.xpose.msra.mxu0 0
      %710 = vmatprep.subr.bf16.mxu0 0
      %711 = vmatpush2.bf16.xpose.msra.mxu0 0
      %712 = vmatprep.subr.bf16.mxu0 0
      %713 = vmatpush2.bf16.xpose.msra.mxu0 0
      %714 = vmatprep.subr.bf16.mxu0 0
      %715 = vmatpush2.bf16.xpose.msra.mxu0 0
      %716 = vmatprep.subr.bf16.mxu0 0
      %717 = vmatpush2.bf16.xpose.msra.mxu0 0
      %718 = vmatprep.mubr.bf16.mxu0 0
      %719 = vmatmul.mubr.bf16.gmra.mxu0 %v681
      %v720 = vpop.f32.mrf.mxu0
      %v721 = vadd.f32 %v311, %v720
      %v722 = vpop.f32.mrf.mxu0
      %v723 = vpop.f32.mrf.mxu0
      %v724 = vadd.f32 %v312, %v723
      %v725 = vpop.f32.mrf.mxu0
      %726 = vdwg.mxu0
      %v728 = vsel %vm585, %v576, 0
      %v731 = vsel %vm585, %v580, 0
      %733 = vmatprep.subr.bf16.mxu0 0
      %734 = vmatpush1.bf16.xpose.msra.mxu0 0
      %735 = vmatprep.subr.bf16.mxu0 0
      %736 = vmatpush1.bf16.xpose.msra.mxu0 0
      %737 = vmatprep.subr.bf16.mxu0 0
      %738 = vmatpush1.bf16.xpose.msra.mxu0 0
      %739 = vmatprep.subr.bf16.mxu0 0
      %740 = vmatpush1.bf16.xpose.msra.mxu0 0
      %741 = vmatprep.subr.bf16.mxu0 0
      %742 = vmatpush1.bf16.xpose.msra.mxu0 0
      %743 = vmatprep.subr.bf16.mxu0 0
      %744 = vmatpush1.bf16.xpose.msra.mxu0 0
      %745 = vmatprep.subr.bf16.mxu0 0
      %746 = vmatpush1.bf16.xpose.msra.mxu0 0
      %747 = vmatprep.subr.bf16.mxu0 0
      %748 = vmatpush1.bf16.xpose.msra.mxu0 %v731
      %749 = vmatprep.subr.bf16.mxu0 0
      %750 = vmatpush2.bf16.xpose.msra.mxu0 0
      %751 = vmatprep.subr.bf16.mxu0 0
      %752 = vmatpush2.bf16.xpose.msra.mxu0 0
      %753 = vmatprep.subr.bf16.mxu0 0
      %754 = vmatpush2.bf16.xpose.msra.mxu0 0
      %755 = vmatprep.subr.bf16.mxu0 0
      %756 = vmatpush2.bf16.xpose.msra.mxu0 0
      %757 = vmatprep.subr.bf16.mxu0 0
      %758 = vmatpush2.bf16.xpose.msra.mxu0 0
      %759 = vmatprep.subr.bf16.mxu0 0
      %760 = vmatpush2.bf16.xpose.msra.mxu0 0
      %761 = vmatprep.subr.bf16.mxu0 0
      %762 = vmatpush2.bf16.xpose.msra.mxu0 0
      %763 = vmatprep.subr.bf16.mxu0 0
      %764 = vmatpush2.bf16.xpose.msra.mxu0 0
      %765 = vmatprep.mubr.bf16.mxu0 0
      %766 = vmatmul.mubr.bf16.gmra.mxu0 %v728
      %v767 = vpop.f32.mrf.mxu0
      %v768 = vadd.f32 %v313, %v767
      %v769 = vpop.f32.mrf.mxu0
      %v770 = vpop.f32.mrf.mxu0
      %v771 = vadd.f32 %v314, %v770
      %v772 = vpop.f32.mrf.mxu0
      %773 = vdwg.mxu0
      %v774 = vsel %vm585, %v627, -inf
      %775 = vmax.xlane.f32.xlu0 %v774
      %v776 = vpop.xlane.xlu0 %775
      %v777 = vsel %vm585, %v630, -inf
      %778 = vmax.xlane.f32.xlu0 %v777
      %v779 = vpop.xlane.xlu0 %778
      %v780 = vsel %vm585, %v674, -inf
      %781 = vmax.xlane.f32.xlu0 %v780
      %v782 = vpop.xlane.xlu0 %781
      %v783 = vsel %vm585, %v677, -inf
      %784 = vmax.xlane.f32.xlu0 %v783
      %v785 = vpop.xlane.xlu0 %784
      %v786 = vsel %vm585, %v721, -inf
      %787 = vmax.xlane.f32.xlu0 %v786
      %v788 = vpop.xlane.xlu0 %787
      %v789 = vsel %vm585, %v724, -inf
      %790 = vmax.xlane.f32.xlu0 %v789
      %v791 = vpop.xlane.xlu0 %790
      %v792 = vsel %vm585, %v768, -inf
      %793 = vmax.xlane.f32.xlu0 %v792
      %v794 = vpop.xlane.xlu0 %793
      %v795 = vsel %vm585, %v771, -inf
      %796 = vmax.xlane.f32.xlu0 %v795
      %v797 = vpop.xlane.xlu0 %796
      %v798 = vsub.f32 %v627, %v776
      %v799 = vsub.f32 %v630, %v779
      %v800 = vsub.f32 %v674, %v782
      %v801 = vsub.f32 %v677, %v785
      %v802 = vsub.f32 %v721, %v788
      %v803 = vsub.f32 %v724, %v791
      %v804 = vsub.f32 %v768, %v794
      %v805 = vsub.f32 %v771, %v797
      %v806 = vmul.f32 %v798, 1.442695
      %v807 = vpow.pop %v806
      %v808 = vmul.f32 %v799, 1.442695
      %v809 = vpow.pop %v808
      %v810 = vmul.f32 %v800, 1.442695
      %v811 = vpow.pop %v810
      %v812 = vmul.f32 %v801, 1.442695
      %v813 = vpow.pop %v812
      %v814 = vmul.f32 %v802, 1.442695
      %v815 = vpow.pop %v814
      %v816 = vmul.f32 %v803, 1.442695
      %v817 = vpow.pop %v816
      %v818 = vmul.f32 %v804, 1.442695
      %v819 = vpow.pop %v818
      %v820 = vmul.f32 %v805, 1.442695
      %v821 = vpow.pop %v820
      %v822 = vsel %vm585, %v807, 0.0
      %823 = vadd.xlane.f32.xlu0 %v822
      %v824 = vpop.xlane.xlu0 %823
      %v825 = vsel %vm585, %v809, 0.0
      %826 = vadd.xlane.f32.xlu0 %v825
      %v827 = vpop.xlane.xlu0 %826
      %v828 = vsel %vm585, %v811, 0.0
      %829 = vadd.xlane.f32.xlu0 %v828
      %v830 = vpop.xlane.xlu0 %829
      %v831 = vsel %vm585, %v813, 0.0
      %832 = vadd.xlane.f32.xlu0 %v831
      %v833 = vpop.xlane.xlu0 %832
      %v834 = vsel %vm585, %v815, 0.0
      %835 = vadd.xlane.f32.xlu0 %v834
      %v836 = vpop.xlane.xlu0 %835
      %v837 = vsel %vm585, %v817, 0.0
      %838 = vadd.xlane.f32.xlu0 %v837
      %v839 = vpop.xlane.xlu0 %838
      %v840 = vsel %vm585, %v819, 0.0
      %841 = vadd.xlane.f32.xlu0 %v840
      %v842 = vpop.xlane.xlu0 %841
      %v843 = vsel %vm585, %v821, 0.0
      %844 = vadd.xlane.f32.xlu0 %v843
      %v845 = vpop.xlane.xlu0 %844
      %v846 = vrcp.pop %v824
      %v847 = vrcp.pop %v827
      %v848 = vrcp.pop %v830
      %v849 = vrcp.pop %v833
      %v850 = vrcp.pop %v836
      %v851 = vrcp.pop %v839
      %v852 = vrcp.pop %v842
      %v853 = vrcp.pop %v845
      %v854 = vmul.f32 %v807, %v846
      %v855 = vmul.f32 %v809, %v847
      %v856 = vmul.f32 %v811, %v848
      %v857 = vmul.f32 %v813, %v849
      %v858 = vmul.f32 %v815, %v850
      %v859 = vmul.f32 %v817, %v851
      %v860 = vmul.f32 %v819, %v852
      %v861 = vmul.f32 %v821, %v853
      %v862 = vpack.c.bf16 %v855, %v854
      %v863 = vpack.c.bf16 %v857, %v856
      %v864 = vpack.c.bf16 %v859, %v858
      %v865 = vpack.c.bf16 %v861, %v860
      %v867 = vsel %vm585, %v862, 0
      %869 = vmatprep.subr.bf16.mxu0 0
      %870 = vmatpush1.bf16.msra.mxu0 0
      %871 = vmatprep.subr.bf16.mxu0 0
      %872 = vmatpush1.bf16.msra.mxu0 0
      %873 = vmatprep.subr.bf16.mxu0 0
      %874 = vmatpush1.bf16.msra.mxu0 0
      %875 = vmatprep.subr.bf16.mxu0 0
      %876 = vmatpush1.bf16.msra.mxu0 0
      %877 = vmatprep.subr.bf16.mxu0 0
      %878 = vmatpush1.bf16.msra.mxu0 0
      %879 = vmatprep.subr.bf16.mxu0 0
      %880 = vmatpush1.bf16.msra.mxu0 0
      %881 = vmatprep.subr.bf16.mxu0 0
      %882 = vmatpush1.bf16.msra.mxu0 0
      %883 = vmatprep.subr.bf16.mxu0 0
      %884 = vmatpush1.bf16.msra.mxu0 %v581
      %885 = vmatprep.subr.bf16.mxu0 0
      %886 = vmatpush2.bf16.msra.mxu0 0
      %887 = vmatprep.subr.bf16.mxu0 0
      %888 = vmatpush2.bf16.msra.mxu0 0
      %889 = vmatprep.subr.bf16.mxu0 0
      %890 = vmatpush2.bf16.msra.mxu0 0
      %891 = vmatprep.subr.bf16.mxu0 0
      %892 = vmatpush2.bf16.msra.mxu0 0
      %893 = vmatprep.subr.bf16.mxu0 0
      %894 = vmatpush2.bf16.msra.mxu0 0
      %895 = vmatprep.subr.bf16.mxu0 0
      %896 = vmatpush2.bf16.msra.mxu0 0
      %897 = vmatprep.subr.bf16.mxu0 0
      %898 = vmatpush2.bf16.msra.mxu0 0
      %899 = vmatprep.subr.bf16.mxu0 0
      %900 = vmatpush2.bf16.msra.mxu0 0
      %901 = vmatprep.mubr.bf16.mxu0 0
      %902 = vmatmul.mubr.bf16.gmra.mxu0 %v867
      %v903 = vpop.f32.mrf.mxu0
      %v904 = vadd.f32 0.0, %v903
      %v905 = vpop.f32.mrf.mxu0
      %v906 = vpop.f32.mrf.mxu0
      %v907 = vadd.f32 0.0, %v906
      %v908 = vpop.f32.mrf.mxu0
      %909 = vdwg.mxu0
      %v911 = vsel %vm585, %v863, 0
      %913 = vmatprep.subr.bf16.mxu0 0
      %914 = vmatpush1.bf16.msra.mxu0 0
      %915 = vmatprep.subr.bf16.mxu0 0
      %916 = vmatpush1.bf16.msra.mxu0 0
      %917 = vmatprep.subr.bf16.mxu0 0
      %918 = vmatpush1.bf16.msra.mxu0 0
      %919 = vmatprep.subr.bf16.mxu0 0
      %920 = vmatpush1.bf16.msra.mxu0 0
      %921 = vmatprep.subr.bf16.mxu0 0
      %922 = vmatpush1.bf16.msra.mxu0 0
      %923 = vmatprep.subr.bf16.mxu0 0
      %924 = vmatpush1.bf16.msra.mxu0 0
      %925 = vmatprep.subr.bf16.mxu0 0
      %926 = vmatpush1.bf16.msra.mxu0 0
      %927 = vmatprep.subr.bf16.mxu0 0
      %928 = vmatpush1.bf16.msra.mxu0 %v582
      %929 = vmatprep.subr.bf16.mxu0 0
      %930 = vmatpush2.bf16.msra.mxu0 0
      %931 = vmatprep.subr.bf16.mxu0 0
      %932 = vmatpush2.bf16.msra.mxu0 0
      %933 = vmatprep.subr.bf16.mxu0 0
      %934 = vmatpush2.bf16.msra.mxu0 0
      %935 = vmatprep.subr.bf16.mxu0 0
      %936 = vmatpush2.bf16.msra.mxu0 0
      %937 = vmatprep.subr.bf16.mxu0 0
      %938 = vmatpush2.bf16.msra.mxu0 0
      %939 = vmatprep.subr.bf16.mxu0 0
      %940 = vmatpush2.bf16.msra.mxu0 0
      %941 = vmatprep.subr.bf16.mxu0 0
      %942 = vmatpush2.bf16.msra.mxu0 0
      %943 = vmatprep.subr.bf16.mxu0 0
      %944 = vmatpush2.bf16.msra.mxu0 0
      %945 = vmatprep.mubr.bf16.mxu0 0
      %946 = vmatmul.mubr.bf16.gmra.mxu0 %v911
      %v947 = vpop.f32.mrf.mxu0
      %v948 = vadd.f32 0.0, %v947
      %v949 = vpop.f32.mrf.mxu0
      %v950 = vpop.f32.mrf.mxu0
      %v951 = vadd.f32 0.0, %v950
      %v952 = vpop.f32.mrf.mxu0
      %953 = vdwg.mxu0
      %v955 = vsel %vm585, %v864, 0
      %957 = vmatprep.subr.bf16.mxu0 0
      %958 = vmatpush1.bf16.msra.mxu0 0
      %959 = vmatprep.subr.bf16.mxu0 0
      %960 = vmatpush1.bf16.msra.mxu0 0
      %961 = vmatprep.subr.bf16.mxu0 0
      %962 = vmatpush1.bf16.msra.mxu0 0
      %963 = vmatprep.subr.bf16.mxu0 0
      %964 = vmatpush1.bf16.msra.mxu0 0
      %965 = vmatprep.subr.bf16.mxu0 0
      %966 = vmatpush1.bf16.msra.mxu0 0
      %967 = vmatprep.subr.bf16.mxu0 0
      %968 = vmatpush1.bf16.msra.mxu0 0
      %969 = vmatprep.subr.bf16.mxu0 0
      %970 = vmatpush1.bf16.msra.mxu0 0
      %971 = vmatprep.subr.bf16.mxu0 0
      %972 = vmatpush1.bf16.msra.mxu0 %v583
      %973 = vmatprep.subr.bf16.mxu0 0
      %974 = vmatpush2.bf16.msra.mxu0 0
      %975 = vmatprep.subr.bf16.mxu0 0
      %976 = vmatpush2.bf16.msra.mxu0 0
      %977 = vmatprep.subr.bf16.mxu0 0
      %978 = vmatpush2.bf16.msra.mxu0 0
      %979 = vmatprep.subr.bf16.mxu0 0
      %980 = vmatpush2.bf16.msra.mxu0 0
      %981 = vmatprep.subr.bf16.mxu0 0
      %982 = vmatpush2.bf16.msra.mxu0 0
      %983 = vmatprep.subr.bf16.mxu0 0
      %984 = vmatpush2.bf16.msra.mxu0 0
      %985 = vmatprep.subr.bf16.mxu0 0
      %986 = vmatpush2.bf16.msra.mxu0 0
      %987 = vmatprep.subr.bf16.mxu0 0
      %988 = vmatpush2.bf16.msra.mxu0 0
      %989 = vmatprep.mubr.bf16.mxu0 0
      %990 = vmatmul.mubr.bf16.gmra.mxu0 %v955
      %v991 = vpop.f32.mrf.mxu0
      %v992 = vadd.f32 0.0, %v991
      %v993 = vpop.f32.mrf.mxu0
      %v994 = vpop.f32.mrf.mxu0
      %v995 = vadd.f32 0.0, %v994
      %v996 = vpop.f32.mrf.mxu0
      %997 = vdwg.mxu0
      %v999 = vsel %vm585, %v865, 0
      %1001 = vmatprep.subr.bf16.mxu0 0
      %1002 = vmatpush1.bf16.msra.mxu0 0
      %1003 = vmatprep.subr.bf16.mxu0 0
      %1004 = vmatpush1.bf16.msra.mxu0 0
      %1005 = vmatprep.subr.bf16.mxu0 0
      %1006 = vmatpush1.bf16.msra.mxu0 0
      %1007 = vmatprep.subr.bf16.mxu0 0
      %1008 = vmatpush1.bf16.msra.mxu0 0
      %1009 = vmatprep.subr.bf16.mxu0 0
      %1010 = vmatpush1.bf16.msra.mxu0 0
      %1011 = vmatprep.subr.bf16.mxu0 0
      %1012 = vmatpush1.bf16.msra.mxu0 0
      %1013 = vmatprep.subr.bf16.mxu0 0
      %1014 = vmatpush1.bf16.msra.mxu0 0
      %1015 = vmatprep.subr.bf16.mxu0 0
      %1016 = vmatpush1.bf16.msra.mxu0 %v584
      %1017 = vmatprep.subr.bf16.mxu0 0
      %1018 = vmatpush2.bf16.msra.mxu0 0
      %1019 = vmatprep.subr.bf16.mxu0 0
      %1020 = vmatpush2.bf16.msra.mxu0 0
      %1021 = vmatprep.subr.bf16.mxu0 0
      %1022 = vmatpush2.bf16.msra.mxu0 0
      %1023 = vmatprep.subr.bf16.mxu0 0
      %1024 = vmatpush2.bf16.msra.mxu0 0
      %1025 = vmatprep.subr.bf16.mxu0 0
      %1026 = vmatpush2.bf16.msra.mxu0 0
      %1027 = vmatprep.subr.bf16.mxu0 0
      %1028 = vmatpush2.bf16.msra.mxu0 0
      %1029 = vmatprep.subr.bf16.mxu0 0
      %1030 = vmatpush2.bf16.msra.mxu0 0
      %1031 = vmatprep.subr.bf16.mxu0 0
      %1032 = vmatpush2.bf16.msra.mxu0 0
      %1033 = vmatprep.mubr.bf16.mxu0 0
      %1034 = vmatmul.mubr.bf16.gmra.mxu0 %v999
      %v1035 = vpop.f32.mrf.mxu0
      %v1036 = vadd.f32 0.0, %v1035
      %v1037 = vpop.f32.mrf.mxu0
      %v1038 = vpop.f32.mrf.mxu0
      %v1039 = vadd.f32 0.0, %v1038
      %v1040 = vpop.f32.mrf.mxu0
      %1041 = vdwg.mxu0
      %v1042 = vpack.c.bf16 %v907, %v904
      %v1043 = vpack.c.bf16 %v951, %v948
      %v1044 = vpack.c.bf16 %v995, %v992
      %v1045 = vpack.c.bf16 %v1039, %v1036
      %v1046 = vld [vmem:[%s2] sm:$0xf]
      %v1047 = vld [vmem:[%s2 + $0x4] sm:$0xf]
      %s1048 = scalar_lea.vmem %s1, 16
      %v1049 = vld [vmem:[%s1048] sm:$0xf]
      %v1050 = vld [vmem:[%s1048 + $0x4] sm:$0xf]
      %v1051 = vld [vmem:[%s1048 + $0x8] sm:$0xf]
      %v1052 = vld [vmem:[%s1048 + $0xc] sm:$0xf]
      %v1057 = vunpack.c.l.b16 %v1049
      %v1058 = vunpack.c.l.b16 %v1050
      %v1059 = vunpack.c.l.b16 %v1051
      %v1060 = vunpack.c.l.b16 %v1052
      %v1061 = vpack.c.b16 %v1058, %v1057
      %v1062 = vpack.c.b16 %v1060, %v1059
      %1065 = vmatprep.subr.bf16.mxu0 0
      %1066 = vmatpush1.bf16.msra.mxu0 0
      %1067 = vmatprep.subr.bf16.mxu0 0
      %1068 = vmatpush1.bf16.msra.mxu0 0
      %1069 = vmatprep.subr.bf16.mxu0 0
      %1070 = vmatpush1.bf16.msra.mxu0 0
      %1071 = vmatprep.subr.bf16.mxu0 0
      %1072 = vmatpush1.bf16.msra.mxu0 0
      %1073 = vmatprep.subr.bf16.mxu0 0
      %1074 = vmatpush1.bf16.msra.mxu0 0
      %1075 = vmatprep.subr.bf16.mxu0 0
      %1076 = vmatpush1.bf16.msra.mxu0 0
      %1077 = vmatprep.subr.bf16.mxu0 0
      %1078 = vmatpush1.bf16.msra.mxu0 %v1062
      %1079 = vmatprep.subr.bf16.mxu0 0
      %1080 = vmatpush1.bf16.msra.mxu0 %v1061
      %1081 = vmatprep.subr.bf16.mxu0 0
      %1082 = vmatpush2.bf16.msra.mxu0 0
      %1083 = vmatprep.subr.bf16.mxu0 0
      %1084 = vmatpush2.bf16.msra.mxu0 0
      %1085 = vmatprep.subr.bf16.mxu0 0
      %1086 = vmatpush2.bf16.msra.mxu0 0
      %1087 = vmatprep.subr.bf16.mxu0 0
      %1088 = vmatpush2.bf16.msra.mxu0 0
      %1089 = vmatprep.subr.bf16.mxu0 0
      %1090 = vmatpush2.bf16.msra.mxu0 0
      %1091 = vmatprep.subr.bf16.mxu0 0
      %1092 = vmatpush2.bf16.msra.mxu0 0
      %1093 = vmatprep.subr.bf16.mxu0 0
      %1094 = vmatpush2.bf16.msra.mxu0 0
      %1095 = vmatprep.subr.bf16.mxu0 0
      %1096 = vmatpush2.bf16.msra.mxu0 0
      %1097 = vmatprep.mubr.bf16.mxu0 0
      %1098 = vmatmul.mubr.bf16.gmra.mxu0 %v333
      %v1099 = vpop.f32.mrf.mxu0
      %v1100 = vadd.f32 0.0, %v1099
      %v1101 = vpop.f32.mrf.mxu0
      %v1102 = vpop.f32.mrf.mxu0
      %v1103 = vadd.f32 0.0, %v1102
      %v1104 = vpop.f32.mrf.mxu0
      %1105 = vmatprep.mubr.bf16.mxu0 0
      %1106 = vmatmul.mubr.bf16.gmra.mxu0 %v336
      %v1107 = vpop.f32.mrf.mxu0
      %v1108 = vadd.f32 0.0, %v1107
      %v1109 = vpop.f32.mrf.mxu0
      %v1110 = vpop.f32.mrf.mxu0
      %v1111 = vadd.f32 0.0, %v1110
      %v1112 = vpop.f32.mrf.mxu0
      %1113 = vmatprep.mubr.bf16.mxu0 0
      %1114 = vmatmul.mubr.bf16.gmra.mxu0 %v339
      %v1115 = vpop.f32.mrf.mxu0
      %v1116 = vadd.f32 0.0, %v1115
      %v1117 = vpop.f32.mrf.mxu0
      %v1118 = vpop.f32.mrf.mxu0
      %v1119 = vadd.f32 0.0, %v1118
      %v1120 = vpop.f32.mrf.mxu0
      %1121 = vmatprep.mubr.bf16.mxu0 0
      %1122 = vmatmul.mubr.bf16.gmra.mxu0 %v342
      %v1123 = vpop.f32.mrf.mxu0
      %v1124 = vadd.f32 0.0, %v1123
      %v1125 = vpop.f32.mrf.mxu0
      %v1126 = vpop.f32.mrf.mxu0
      %v1127 = vadd.f32 0.0, %v1126
      %v1128 = vpop.f32.mrf.mxu0
      %1129 = vdwg.mxu0
      %s1130 = scalar_lea.vmem %s1, 48
      %v1131 = vld [vmem:[%s1130] sm:$0xf]
      %v1132 = vld [vmem:[%s1130 + $0x4] sm:$0xf]
      %v1133 = vld [vmem:[%s1130 + $0x8] sm:$0xf]
      %v1134 = vld [vmem:[%s1130 + $0xc] sm:$0xf]
      %v1139 = vunpack.c.l.b16 %v1131
      %v1140 = vunpack.c.l.b16 %v1132
      %v1141 = vunpack.c.l.b16 %v1133
      %v1142 = vunpack.c.l.b16 %v1134
      %v1143 = vpack.c.b16 %v1140, %v1139
      %v1144 = vpack.c.b16 %v1142, %v1141
      %1147 = vmatprep.subr.bf16.mxu0 0
      %1148 = vmatpush1.bf16.msra.mxu0 0
      %1149 = vmatprep.subr.bf16.mxu0 0
      %1150 = vmatpush1.bf16.msra.mxu0 0
      %1151 = vmatprep.subr.bf16.mxu0 0
      %1152 = vmatpush1.bf16.msra.mxu0 0
      %1153 = vmatprep.subr.bf16.mxu0 0
      %1154 = vmatpush1.bf16.msra.mxu0 0
      %1155 = vmatprep.subr.bf16.mxu0 0
      %1156 = vmatpush1.bf16.msra.mxu0 0
      %1157 = vmatprep.subr.bf16.mxu0 0
      %1158 = vmatpush1.bf16.msra.mxu0 0
      %1159 = vmatprep.subr.bf16.mxu0 0
      %1160 = vmatpush1.bf16.msra.mxu0 %v1144
      %1161 = vmatprep.subr.bf16.mxu0 0
      %1162 = vmatpush1.bf16.msra.mxu0 %v1143
      %1163 = vmatprep.subr.bf16.mxu0 0
      %1164 = vmatpush2.bf16.msra.mxu0 0
      %1165 = vmatprep.subr.bf16.mxu0 0
      %1166 = vmatpush2.bf16.msra.mxu0 0
      %1167 = vmatprep.subr.bf16.mxu0 0
      %1168 = vmatpush2.bf16.msra.mxu0 0
      %1169 = vmatprep.subr.bf16.mxu0 0
      %1170 = vmatpush2.bf16.msra.mxu0 0
      %1171 = vmatprep.subr.bf16.mxu0 0
      %1172 = vmatpush2.bf16.msra.mxu0 0
      %1173 = vmatprep.subr.bf16.mxu0 0
      %1174 = vmatpush2.bf16.msra.mxu0 0
      %1175 = vmatprep.subr.bf16.mxu0 0
      %1176 = vmatpush2.bf16.msra.mxu0 0
      %1177 = vmatprep.subr.bf16.mxu0 0
      %1178 = vmatpush2.bf16.msra.mxu0 0
      %1179 = vmatprep.mubr.bf16.mxu0 0
      %1180 = vmatmul.mubr.bf16.gmra.mxu0 %v333
      %v1181 = vpop.f32.mrf.mxu0
      %v1182 = vadd.f32 0.0, %v1181
      %v1183 = vpop.f32.mrf.mxu0
      %v1184 = vpop.f32.mrf.mxu0
      %v1185 = vadd.f32 0.0, %v1184
      %v1186 = vpop.f32.mrf.mxu0
      %1187 = vmatprep.mubr.bf16.mxu0 0
      %1188 = vmatmul.mubr.bf16.gmra.mxu0 %v336
      %v1189 = vpop.f32.mrf.mxu0
      %v1190 = vadd.f32 0.0, %v1189
      %v1191 = vpop.f32.mrf.mxu0
      %v1192 = vpop.f32.mrf.mxu0
      %v1193 = vadd.f32 0.0, %v1192
      %v1194 = vpop.f32.mrf.mxu0
      %1195 = vmatprep.mubr.bf16.mxu0 0
      %1196 = vmatmul.mubr.bf16.gmra.mxu0 %v339
      %v1197 = vpop.f32.mrf.mxu0
      %v1198 = vadd.f32 0.0, %v1197
      %v1199 = vpop.f32.mrf.mxu0
      %v1200 = vpop.f32.mrf.mxu0
      %v1201 = vadd.f32 0.0, %v1200
      %v1202 = vpop.f32.mrf.mxu0
      %1203 = vmatprep.mubr.bf16.mxu0 0
      %1204 = vmatmul.mubr.bf16.gmra.mxu0 %v342
      %v1205 = vpop.f32.mrf.mxu0
      %v1206 = vadd.f32 0.0, %v1205
      %v1207 = vpop.f32.mrf.mxu0
      %v1208 = vpop.f32.mrf.mxu0
      %v1209 = vadd.f32 0.0, %v1208
      %v1210 = vpop.f32.mrf.mxu0
      %1211 = vdwg.mxu0
      %s1212 = scalar_lea.vmem %s1, 80
      %v1213 = vld [vmem:[%s1212] sm:$0xf]
      %v1214 = vld [vmem:[%s1212 + $0x4] sm:$0xf]
      %v1215 = vld [vmem:[%s1212 + $0x8] sm:$0xf]
      %v1216 = vld [vmem:[%s1212 + $0xc] sm:$0xf]
      %v1221 = vunpack.c.l.b16 %v1213
      %v1222 = vunpack.c.l.b16 %v1214
      %v1223 = vunpack.c.l.b16 %v1215
      %v1224 = vunpack.c.l.b16 %v1216
      %v1225 = vpack.c.b16 %v1222, %v1221
      %v1226 = vpack.c.b16 %v1224, %v1223
      %1229 = vmatprep.subr.bf16.mxu0 0
      %1230 = vmatpush1.bf16.msra.mxu0 0
      %1231 = vmatprep.subr.bf16.mxu0 0
      %1232 = vmatpush1.bf16.msra.mxu0 0
      %1233 = vmatprep.subr.bf16.mxu0 0
      %1234 = vmatpush1.bf16.msra.mxu0 0
      %1235 = vmatprep.subr.bf16.mxu0 0
      %1236 = vmatpush1.bf16.msra.mxu0 0
      %1237 = vmatprep.subr.bf16.mxu0 0
      %1238 = vmatpush1.bf16.msra.mxu0 0
      %1239 = vmatprep.subr.bf16.mxu0 0
      %1240 = vmatpush1.bf16.msra.mxu0 0
      %1241 = vmatprep.subr.bf16.mxu0 0
      %1242 = vmatpush1.bf16.msra.mxu0 %v1226
      %1243 = vmatprep.subr.bf16.mxu0 0
      %1244 = vmatpush1.bf16.msra.mxu0 %v1225
      %1245 = vmatprep.subr.bf16.mxu0 0
      %1246 = vmatpush2.bf16.msra.mxu0 0
      %1247 = vmatprep.subr.bf16.mxu0 0
      %1248 = vmatpush2.bf16.msra.mxu0 0
      %1249 = vmatprep.subr.bf16.mxu0 0
      %1250 = vmatpush2.bf16.msra.mxu0 0
      %1251 = vmatprep.subr.bf16.mxu0 0
      %1252 = vmatpush2.bf16.msra.mxu0 0
      %1253 = vmatprep.subr.bf16.mxu0 0
      %1254 = vmatpush2.bf16.msra.mxu0 0
      %1255 = vmatprep.subr.bf16.mxu0 0
      %1256 = vmatpush2.bf16.msra.mxu0 0
      %1257 = vmatprep.subr.bf16.mxu0 0
      %1258 = vmatpush2.bf16.msra.mxu0 0
      %1259 = vmatprep.subr.bf16.mxu0 0
      %1260 = vmatpush2.bf16.msra.mxu0 0
      %1261 = vmatprep.mubr.bf16.mxu0 0
      %1262 = vmatmul.mubr.bf16.gmra.mxu0 %v333
      %v1263 = vpop.f32.mrf.mxu0
      %v1264 = vadd.f32 0.0, %v1263
      %v1265 = vpop.f32.mrf.mxu0
      %v1266 = vpop.f32.mrf.mxu0
      %v1267 = vadd.f32 0.0, %v1266
      %v1268 = vpop.f32.mrf.mxu0
      %1269 = vmatprep.mubr.bf16.mxu0 0
      %1270 = vmatmul.mubr.bf16.gmra.mxu0 %v336
      %v1271 = vpop.f32.mrf.mxu0
      %v1272 = vadd.f32 0.0, %v1271
      %v1273 = vpop.f32.mrf.mxu0
      %v1274 = vpop.f32.mrf.mxu0
      %v1275 = vadd.f32 0.0, %v1274
      %v1276 = vpop.f32.mrf.mxu0
      %1277 = vmatprep.mubr.bf16.mxu0 0
      %1278 = vmatmul.mubr.bf16.gmra.mxu0 %v339
      %v1279 = vpop.f32.mrf.mxu0
      %v1280 = vadd.f32 0.0, %v1279
      %v1281 = vpop.f32.mrf.mxu0
      %v1282 = vpop.f32.mrf.mxu0
      %v1283 = vadd.f32 0.0, %v1282
      %v1284 = vpop.f32.mrf.mxu0
      %1285 = vmatprep.mubr.bf16.mxu0 0
      %1286 = vmatmul.mubr.bf16.gmra.mxu0 %v342
      %v1287 = vpop.f32.mrf.mxu0
      %v1288 = vadd.f32 0.0, %v1287
      %v1289 = vpop.f32.mrf.mxu0
      %v1290 = vpop.f32.mrf.mxu0
      %v1291 = vadd.f32 0.0, %v1290
      %v1292 = vpop.f32.mrf.mxu0
      %1293 = vdwg.mxu0
      %v1294 = vpack.c.bf16 %v1103, %v1100
      %v1295 = vpack.c.bf16 %v1111, %v1108
      %v1296 = vpack.c.bf16 %v1119, %v1116
      %v1297 = vpack.c.bf16 %v1127, %v1124
      %v1298 = vpack.c.bf16 %v1185, %v1182
      %v1299 = vpack.c.bf16 %v1193, %v1190
      %v1300 = vpack.c.bf16 %v1201, %v1198
      %v1301 = vpack.c.bf16 %v1209, %v1206
      %v1302 = vpack.c.bf16 %v1267, %v1264
      %v1303 = vpack.c.bf16 %v1275, %v1272
      %v1304 = vpack.c.bf16 %v1283, %v1280
      %v1305 = vpack.c.bf16 %v1291, %v1288
      %v1307 = vsel %vm585, %v1294, 0
      %v1310 = vsel %vm585, %v1298, 0
      %1312 = vmatprep.subr.bf16.mxu0 0
      %1313 = vmatpush1.bf16.xpose.msra.mxu0 0
      %1314 = vmatprep.subr.bf16.mxu0 0
      %1315 = vmatpush1.bf16.xpose.msra.mxu0 0
      %1316 = vmatprep.subr.bf16.mxu0 0
      %1317 = vmatpush1.bf16.xpose.msra.mxu0 0
      %1318 = vmatprep.subr.bf16.mxu0 0
      %1319 = vmatpush1.bf16.xpose.msra.mxu0 0
      %1320 = vmatprep.subr.bf16.mxu0 0
      %1321 = vmatpush1.bf16.xpose.msra.mxu0 0
      %1322 = vmatprep.subr.bf16.mxu0 0
      %1323 = vmatpush1.bf16.xpose.msra.mxu0 0
      %1324 = vmatprep.subr.bf16.mxu0 0
      %1325 = vmatpush1.bf16.xpose.msra.mxu0 0
      %1326 = vmatprep.subr.bf16.mxu0 0
      %1327 = vmatpush1.bf16.xpose.msra.mxu0 %v1310
      %1328 = vmatprep.subr.bf16.mxu0 0
      %1329 = vmatpush2.bf16.xpose.msra.mxu0 0
      %1330 = vmatprep.subr.bf16.mxu0 0
      %1331 = vmatpush2.bf16.xpose.msra.mxu0 0
      %1332 = vmatprep.subr.bf16.mxu0 0
      %1333 = vmatpush2.bf16.xpose.msra.mxu0 0
      %1334 = vmatprep.subr.bf16.mxu0 0
      %1335 = vmatpush2.bf16.xpose.msra.mxu0 0
      %1336 = vmatprep.subr.bf16.mxu0 0
      %1337 = vmatpush2.bf16.xpose.msra.mxu0 0
      %1338 = vmatprep.subr.bf16.mxu0 0
      %1339 = vmatpush2.bf16.xpose.msra.mxu0 0
      %1340 = vmatprep.subr.bf16.mxu0 0
      %1341 = vmatpush2.bf16.xpose.msra.mxu0 0
      %1342 = vmatprep.subr.bf16.mxu0 0
      %1343 = vmatpush2.bf16.xpose.msra.mxu0 0
      %1344 = vmatprep.mubr.bf16.mxu0 0
      %1345 = vmatmul.mubr.bf16.gmra.mxu0 %v1307
      %v1346 = vpop.f32.mrf.mxu0
      %v1347 = vadd.f32 %v307, %v1346
      %v1348 = vpop.f32.mrf.mxu0
      %v1349 = vpop.f32.mrf.mxu0
      %v1350 = vadd.f32 %v308, %v1349
      %v1351 = vpop.f32.mrf.mxu0
      %1352 = vdwg.mxu0
      %v1354 = vsel %vm585, %v1295, 0
      %v1357 = vsel %vm585, %v1299, 0
      %1359 = vmatprep.subr.bf16.mxu0 0
      %1360 = vmatpush1.bf16.xpose.msra.mxu0 0
      %1361 = vmatprep.subr.bf16.mxu0 0
      %1362 = vmatpush1.bf16.xpose.msra.mxu0 0
      %1363 = vmatprep.subr.bf16.mxu0 0
      %1364 = vmatpush1.bf16.xpose.msra.mxu0 0
      %1365 = vmatprep.subr.bf16.mxu0 0
      %1366 = vmatpush1.bf16.xpose.msra.mxu0 0
      %1367 = vmatprep.subr.bf16.mxu0 0
      %1368 = vmatpush1.bf16.xpose.msra.mxu0 0
      %1369 = vmatprep.subr.bf16.mxu0 0
      %1370 = vmatpush1.bf16.xpose.msra.mxu0 0
      %1371 = vmatprep.subr.bf16.mxu0 0
      %1372 = vmatpush1.bf16.xpose.msra.mxu0 0
      %1373 = vmatprep.subr.bf16.mxu0 0
      %1374 = vmatpush1.bf16.xpose.msra.mxu0 %v1357
      %1375 = vmatprep.subr.bf16.mxu0 0
      %1376 = vmatpush2.bf16.xpose.msra.mxu0 0
      %1377 = vmatprep.subr.bf16.mxu0 0
      %1378 = vmatpush2.bf16.xpose.msra.mxu0 0
      %1379 = vmatprep.subr.bf16.mxu0 0
      %1380 = vmatpush2.bf16.xpose.msra.mxu0 0
      %1381 = vmatprep.subr.bf16.mxu0 0
      %1382 = vmatpush2.bf16.xpose.msra.mxu0 0
      %1383 = vmatprep.subr.bf16.mxu0 0
      %1384 = vmatpush2.bf16.xpose.msra.mxu0 0
      %1385 = vmatprep.subr.bf16.mxu0 0
      %1386 = vmatpush2.bf16.xpose.msra.mxu0 0
      %1387 = vmatprep.subr.bf16.mxu0 0
      %1388 = vmatpush2.bf16.xpose.msra.mxu0 0
      %1389 = vmatprep.subr.bf16.mxu0 0
      %1390 = vmatpush2.bf16.xpose.msra.mxu0 0
      %1391 = vmatprep.mubr.bf16.mxu0 0
      %1392 = vmatmul.mubr.bf16.gmra.mxu0 %v1354
      %v1393 = vpop.f32.mrf.mxu0
      %v1394 = vadd.f32 %v309, %v1393
      %v1395 = vpop.f32.mrf.mxu0
      %v1396 = vpop.f32.mrf.mxu0
      %v1397 = vadd.f32 %v310, %v1396
      %v1398 = vpop.f32.mrf.mxu0
      %1399 = vdwg.mxu0
      %v1401 = vsel %vm585, %v1296, 0
      %v1404 = vsel %vm585, %v1300, 0
      %1406 = vmatprep.subr.bf16.mxu0 0
      %1407 = vmatpush1.bf16.xpose.msra.mxu0 0
      %1408 = vmatprep.subr.bf16.mxu0 0
      %1409 = vmatpush1.bf16.xpose.msra.mxu0 0
      %1410 = vmatprep.subr.bf16.mxu0 0
      %1411 = vmatpush1.bf16.xpose.msra.mxu0 0
      %1412 = vmatprep.subr.bf16.mxu0 0
      %1413 = vmatpush1.bf16.xpose.msra.mxu0 0
      %1414 = vmatprep.subr.bf16.mxu0 0
      %1415 = vmatpush1.bf16.xpose.msra.mxu0 0
      %1416 = vmatprep.subr.bf16.mxu0 0
      %1417 = vmatpush1.bf16.xpose.msra.mxu0 0
      %1418 = vmatprep.subr.bf16.mxu0 0
      %1419 = vmatpush1.bf16.xpose.msra.mxu0 0
      %1420 = vmatprep.subr.bf16.mxu0 0
      %1421 = vmatpush1.bf16.xpose.msra.mxu0 %v1404
      %1422 = vmatprep.subr.bf16.mxu0 0
      %1423 = vmatpush2.bf16.xpose.msra.mxu0 0
      %1424 = vmatprep.subr.bf16.mxu0 0
      %1425 = vmatpush2.bf16.xpose.msra.mxu0 0
      %1426 = vmatprep.subr.bf16.mxu0 0
      %1427 = vmatpush2.bf16.xpose.msra.mxu0 0
      %1428 = vmatprep.subr.bf16.mxu0 0
      %1429 = vmatpush2.bf16.xpose.msra.mxu0 0
      %1430 = vmatprep.subr.bf16.mxu0 0
      %1431 = vmatpush2.bf16.xpose.msra.mxu0 0
      %1432 = vmatprep.subr.bf16.mxu0 0
      %1433 = vmatpush2.bf16.xpose.msra.mxu0 0
      %1434 = vmatprep.subr.bf16.mxu0 0
      %1435 = vmatpush2.bf16.xpose.msra.mxu0 0
      %1436 = vmatprep.subr.bf16.mxu0 0
      %1437 = vmatpush2.bf16.xpose.msra.mxu0 0
      %1438 = vmatprep.mubr.bf16.mxu0 0
      %1439 = vmatmul.mubr.bf16.gmra.mxu0 %v1401
      %v1440 = vpop.f32.mrf.mxu0
      %v1441 = vadd.f32 %v311, %v1440
      %v1442 = vpop.f32.mrf.mxu0
      %v1443 = vpop.f32.mrf.mxu0
      %v1444 = vadd.f32 %v312, %v1443
      %v1445 = vpop.f32.mrf.mxu0
      %1446 = vdwg.mxu0
      %v1448 = vsel %vm585, %v1297, 0
      %v1451 = vsel %vm585, %v1301, 0
      %1453 = vmatprep.subr.bf16.mxu0 0
      %1454 = vmatpush1.bf16.xpose.msra.mxu0 0
      %1455 = vmatprep.subr.bf16.mxu0 0
      %1456 = vmatpush1.bf16.xpose.msra.mxu0 0
      %1457 = vmatprep.subr.bf16.mxu0 0
      %1458 = vmatpush1.bf16.xpose.msra.mxu0 0
      %1459 = vmatprep.subr.bf16.mxu0 0
      %1460 = vmatpush1.bf16.xpose.msra.mxu0 0
      %1461 = vmatprep.subr.bf16.mxu0 0
      %1462 = vmatpush1.bf16.xpose.msra.mxu0 0
      %1463 = vmatprep.subr.bf16.mxu0 0
      %1464 = vmatpush1.bf16.xpose.msra.mxu0 0
      %1465 = vmatprep.subr.bf16.mxu0 0
      %1466 = vmatpush1.bf16.xpose.msra.mxu0 0
      %1467 = vmatprep.subr.bf16.mxu0 0
      %1468 = vmatpush1.bf16.xpose.msra.mxu0 %v1451
      %1469 = vmatprep.subr.bf16.mxu0 0
      %1470 = vmatpush2.bf16.xpose.msra.mxu0 0
      %1471 = vmatprep.subr.bf16.mxu0 0
      %1472 = vmatpush2.bf16.xpose.msra.mxu0 0
      %1473 = vmatprep.subr.bf16.mxu0 0
      %1474 = vmatpush2.bf16.xpose.msra.mxu0 0
      %1475 = vmatprep.subr.bf16.mxu0 0
      %1476 = vmatpush2.bf16.xpose.msra.mxu0 0
      %1477 = vmatprep.subr.bf16.mxu0 0
      %1478 = vmatpush2.bf16.xpose.msra.mxu0 0
      %1479 = vmatprep.subr.bf16.mxu0 0
      %1480 = vmatpush2.bf16.xpose.msra.mxu0 0
      %1481 = vmatprep.subr.bf16.mxu0 0
      %1482 = vmatpush2.bf16.xpose.msra.mxu0 0
      %1483 = vmatprep.subr.bf16.mxu0 0
      %1484 = vmatpush2.bf16.xpose.msra.mxu0 0
      %1485 = vmatprep.mubr.bf16.mxu0 0
      %1486 = vmatmul.mubr.bf16.gmra.mxu0 %v1448
      %v1487 = vpop.f32.mrf.mxu0
      %v1488 = vadd.f32 %v313, %v1487
      %v1489 = vpop.f32.mrf.mxu0
      %v1490 = vpop.f32.mrf.mxu0
      %v1491 = vadd.f32 %v314, %v1490
      %v1492 = vpop.f32.mrf.mxu0
      %1493 = vdwg.mxu0
      %v1494 = vsel %vm585, %v1347, -inf
      %1495 = vmax.xlane.f32.xlu0 %v1494
      %v1496 = vpop.xlane.xlu0 %1495
      %v1497 = vsel %vm585, %v1350, -inf
      %1498 = vmax.xlane.f32.xlu0 %v1497
      %v1499 = vpop.xlane.xlu0 %1498
      %v1500 = vsel %vm585, %v1394, -inf
      %1501 = vmax.xlane.f32.xlu0 %v1500
      %v1502 = vpop.xlane.xlu0 %1501
      %v1503 = vsel %vm585, %v1397, -inf
      %1504 = vmax.xlane.f32.xlu0 %v1503
      %v1505 = vpop.xlane.xlu0 %1504
      %v1506 = vsel %vm585, %v1441, -inf
      %1507 = vmax.xlane.f32.xlu0 %v1506
      %v1508 = vpop.xlane.xlu0 %1507
      %v1509 = vsel %vm585, %v1444, -inf
      %1510 = vmax.xlane.f32.xlu0 %v1509
      %v1511 = vpop.xlane.xlu0 %1510
      %v1512 = vsel %vm585, %v1488, -inf
      %1513 = vmax.xlane.f32.xlu0 %v1512
      %v1514 = vpop.xlane.xlu0 %1513
      %v1515 = vsel %vm585, %v1491, -inf
      %1516 = vmax.xlane.f32.xlu0 %v1515
      %v1517 = vpop.xlane.xlu0 %1516
      %v1518 = vsub.f32 %v1347, %v1496
      %v1519 = vsub.f32 %v1350, %v1499
      %v1520 = vsub.f32 %v1394, %v1502
      %v1521 = vsub.f32 %v1397, %v1505
      %v1522 = vsub.f32 %v1441, %v1508
      %v1523 = vsub.f32 %v1444, %v1511
      %v1524 = vsub.f32 %v1488, %v1514
      %v1525 = vsub.f32 %v1491, %v1517
      %v1526 = vmul.f32 %v1518, 1.442695
      %v1527 = vpow.pop %v1526
      %v1528 = vmul.f32 %v1519, 1.442695
      %v1529 = vpow.pop %v1528
      %v1530 = vmul.f32 %v1520, 1.442695
      %v1531 = vpow.pop %v1530
      %v1532 = vmul.f32 %v1521, 1.442695
      %v1533 = vpow.pop %v1532
      %v1534 = vmul.f32 %v1522, 1.442695
      %v1535 = vpow.pop %v1534
      %v1536 = vmul.f32 %v1523, 1.442695
      %v1537 = vpow.pop %v1536
      %v1538 = vmul.f32 %v1524, 1.442695
      %v1539 = vpow.pop %v1538
      %v1540 = vmul.f32 %v1525, 1.442695
      %v1541 = vpow.pop %v1540
      %v1542 = vsel %vm585, %v1527, 0.0
      %1543 = vadd.xlane.f32.xlu0 %v1542
      %v1544 = vpop.xlane.xlu0 %1543
      %v1545 = vsel %vm585, %v1529, 0.0
      %1546 = vadd.xlane.f32.xlu0 %v1545
      %v1547 = vpop.xlane.xlu0 %1546
      %v1548 = vsel %vm585, %v1531, 0.0
      %1549 = vadd.xlane.f32.xlu0 %v1548
      %v1550 = vpop.xlane.xlu0 %1549
      %v1551 = vsel %vm585, %v1533, 0.0
      %1552 = vadd.xlane.f32.xlu0 %v1551
      %v1553 = vpop.xlane.xlu0 %1552
      %v1554 = vsel %vm585, %v1535, 0.0
      %1555 = vadd.xlane.f32.xlu0 %v1554
      %v1556 = vpop.xlane.xlu0 %1555
      %v1557 = vsel %vm585, %v1537, 0.0
      %1558 = vadd.xlane.f32.xlu0 %v1557
      %v1559 = vpop.xlane.xlu0 %1558
      %v1560 = vsel %vm585, %v1539, 0.0
      %1561 = vadd.xlane.f32.xlu0 %v1560
      %v1562 = vpop.xlane.xlu0 %1561
      %v1563 = vsel %vm585, %v1541, 0.0
      %1564 = vadd.xlane.f32.xlu0 %v1563
      %v1565 = vpop.xlane.xlu0 %1564
      %v1566 = vrcp.pop %v1544
      %v1567 = vrcp.pop %v1547
      %v1568 = vrcp.pop %v1550
      %v1569 = vrcp.pop %v1553
      %v1570 = vrcp.pop %v1556
      %v1571 = vrcp.pop %v1559
      %v1572 = vrcp.pop %v1562
      %v1573 = vrcp.pop %v1565
      %v1574 = vmul.f32 %v1527, %v1566
      %v1575 = vmul.f32 %v1529, %v1567
      %v1576 = vmul.f32 %v1531, %v1568
      %v1577 = vmul.f32 %v1533, %v1569
      %v1578 = vmul.f32 %v1535, %v1570
      %v1579 = vmul.f32 %v1537, %v1571
      %v1580 = vmul.f32 %v1539, %v1572
      %v1581 = vmul.f32 %v1541, %v1573
      %v1582 = vpack.c.bf16 %v1575, %v1574
      %v1583 = vpack.c.bf16 %v1577, %v1576
      %v1584 = vpack.c.bf16 %v1579, %v1578
      %v1585 = vpack.c.bf16 %v1581, %v1580
      %v1587 = vsel %vm585, %v1582, 0
      %1589 = vmatprep.subr.bf16.mxu0 0
      %1590 = vmatpush1.bf16.msra.mxu0 0
      %1591 = vmatprep.subr.bf16.mxu0 0
      %1592 = vmatpush1.bf16.msra.mxu0 0
      %1593 = vmatprep.subr.bf16.mxu0 0
      %1594 = vmatpush1.bf16.msra.mxu0 0
      %1595 = vmatprep.subr.bf16.mxu0 0
      %1596 = vmatpush1.bf16.msra.mxu0 0
      %1597 = vmatprep.subr.bf16.mxu0 0
      %1598 = vmatpush1.bf16.msra.mxu0 0
      %1599 = vmatprep.subr.bf16.mxu0 0
      %1600 = vmatpush1.bf16.msra.mxu0 0
      %1601 = vmatprep.subr.bf16.mxu0 0
      %1602 = vmatpush1.bf16.msra.mxu0 0
      %1603 = vmatprep.subr.bf16.mxu0 0
      %1604 = vmatpush1.bf16.msra.mxu0 %v1302
      %1605 = vmatprep.subr.bf16.mxu0 0
      %1606 = vmatpush2.bf16.msra.mxu0 0
      %1607 = vmatprep.subr.bf16.mxu0 0
      %1608 = vmatpush2.bf16.msra.mxu0 0
      %1609 = vmatprep.subr.bf16.mxu0 0
      %1610 = vmatpush2.bf16.msra.mxu0 0
      %1611 = vmatprep.subr.bf16.mxu0 0
      %1612 = vmatpush2.bf16.msra.mxu0 0
      %1613 = vmatprep.subr.bf16.mxu0 0
      %1614 = vmatpush2.bf16.msra.mxu0 0
      %1615 = vmatprep.subr.bf16.mxu0 0
      %1616 = vmatpush2.bf16.msra.mxu0 0
      %1617 = vmatprep.subr.bf16.mxu0 0
      %1618 = vmatpush2.bf16.msra.mxu0 0
      %1619 = vmatprep.subr.bf16.mxu0 0
      %1620 = vmatpush2.bf16.msra.mxu0 0
      %1621 = vmatprep.mubr.bf16.mxu0 0
      %1622 = vmatmul.mubr.bf16.gmra.mxu0 %v1587
      %v1623 = vpop.f32.mrf.mxu0
      %v1624 = vadd.f32 0.0, %v1623
      %v1625 = vpop.f32.mrf.mxu0
      %v1626 = vpop.f32.mrf.mxu0
      %v1627 = vadd.f32 0.0, %v1626
      %v1628 = vpop.f32.mrf.mxu0
      %1629 = vdwg.mxu0
      %v1631 = vsel %vm585, %v1583, 0
      %1633 = vmatprep.subr.bf16.mxu0 0
      %1634 = vmatpush1.bf16.msra.mxu0 0
      %1635 = vmatprep.subr.bf16.mxu0 0
      %1636 = vmatpush1.bf16.msra.mxu0 0
      %1637 = vmatprep.subr.bf16.mxu0 0
      %1638 = vmatpush1.bf16.msra.mxu0 0
      %1639 = vmatprep.subr.bf16.mxu0 0
      %1640 = vmatpush1.bf16.msra.mxu0 0
      %1641 = vmatprep.subr.bf16.mxu0 0
      %1642 = vmatpush1.bf16.msra.mxu0 0
      %1643 = vmatprep.subr.bf16.mxu0 0
      %1644 = vmatpush1.bf16.msra.mxu0 0
      %1645 = vmatprep.subr.bf16.mxu0 0
      %1646 = vmatpush1.bf16.msra.mxu0 0
      %1647 = vmatprep.subr.bf16.mxu0 0
      %1648 = vmatpush1.bf16.msra.mxu0 %v1303
      %1649 = vmatprep.subr.bf16.mxu0 0
      %1650 = vmatpush2.bf16.msra.mxu0 0
      %1651 = vmatprep.subr.bf16.mxu0 0
      %1652 = vmatpush2.bf16.msra.mxu0 0
      %1653 = vmatprep.subr.bf16.mxu0 0
      %1654 = vmatpush2.bf16.msra.mxu0 0
      %1655 = vmatprep.subr.bf16.mxu0 0
      %1656 = vmatpush2.bf16.msra.mxu0 0
      %1657 = vmatprep.subr.bf16.mxu0 0
      %1658 = vmatpush2.bf16.msra.mxu0 0
      %1659 = vmatprep.subr.bf16.mxu0 0
      %1660 = vmatpush2.bf16.msra.mxu0 0
      %1661 = vmatprep.subr.bf16.mxu0 0
      %1662 = vmatpush2.bf16.msra.mxu0 0
      %1663 = vmatprep.subr.bf16.mxu0 0
      %1664 = vmatpush2.bf16.msra.mxu0 0
      %1665 = vmatprep.mubr.bf16.mxu0 0
      %1666 = vmatmul.mubr.bf16.gmra.mxu0 %v1631
      %v1667 = vpop.f32.mrf.mxu0
      %v1668 = vadd.f32 0.0, %v1667
      %v1669 = vpop.f32.mrf.mxu0
      %v1670 = vpop.f32.mrf.mxu0
      %v1671 = vadd.f32 0.0, %v1670
      %v1672 = vpop.f32.mrf.mxu0
      %1673 = vdwg.mxu0
      %v1675 = vsel %vm585, %v1584, 0
      %1677 = vmatprep.subr.bf16.mxu0 0
      %1678 = vmatpush1.bf16.msra.mxu0 0
      %1679 = vmatprep.subr.bf16.mxu0 0
      %1680 = vmatpush1.bf16.msra.mxu0 0
      %1681 = vmatprep.subr.bf16.mxu0 0
      %1682 = vmatpush1.bf16.msra.mxu0 0
      %1683 = vmatprep.subr.bf16.mxu0 0
      %1684 = vmatpush1.bf16.msra.mxu0 0
      %1685 = vmatprep.subr.bf16.mxu0 0
      %1686 = vmatpush1.bf16.msra.mxu0 0
      %1687 = vmatprep.subr.bf16.mxu0 0
      %1688 = vmatpush1.bf16.msra.mxu0 0
      %1689 = vmatprep.subr.bf16.mxu0 0
      %1690 = vmatpush1.bf16.msra.mxu0 0
      %1691 = vmatprep.subr.bf16.mxu0 0
      %1692 = vmatpush1.bf16.msra.mxu0 %v1304
      %1693 = vmatprep.subr.bf16.mxu0 0
      %1694 = vmatpush2.bf16.msra.mxu0 0
      %1695 = vmatprep.subr.bf16.mxu0 0
      %1696 = vmatpush2.bf16.msra.mxu0 0
      %1697 = vmatprep.subr.bf16.mxu0 0
      %1698 = vmatpush2.bf16.msra.mxu0 0
      %1699 = vmatprep.subr.bf16.mxu0 0
      %1700 = vmatpush2.bf16.msra.mxu0 0
      %1701 = vmatprep.subr.bf16.mxu0 0
      %1702 = vmatpush2.bf16.msra.mxu0 0
      %1703 = vmatprep.subr.bf16.mxu0 0
      %1704 = vmatpush2.bf16.msra.mxu0 0
      %1705 = vmatprep.subr.bf16.mxu0 0
      %1706 = vmatpush2.bf16.msra.mxu0 0
      %1707 = vmatprep.subr.bf16.mxu0 0
      %1708 = vmatpush2.bf16.msra.mxu0 0
      %1709 = vmatprep.mubr.bf16.mxu0 0
      %1710 = vmatmul.mubr.bf16.gmra.mxu0 %v1675
      %v1711 = vpop.f32.mrf.mxu0
      %v1712 = vadd.f32 0.0, %v1711
      %v1713 = vpop.f32.mrf.mxu0
      %v1714 = vpop.f32.mrf.mxu0
      %v1715 = vadd.f32 0.0, %v1714
      %v1716 = vpop.f32.mrf.mxu0
      %1717 = vdwg.mxu0
      %v1719 = vsel %vm585, %v1585, 0
      %1721 = vmatprep.subr.bf16.mxu0 0
      %1722 = vmatpush1.bf16.msra.mxu0 0
      %1723 = vmatprep.subr.bf16.mxu0 0
      %1724 = vmatpush1.bf16.msra.mxu0 0
      %1725 = vmatprep.subr.bf16.mxu0 0
      %1726 = vmatpush1.bf16.msra.mxu0 0
      %1727 = vmatprep.subr.bf16.mxu0 0
      %1728 = vmatpush1.bf16.msra.mxu0 0
      %1729 = vmatprep.subr.bf16.mxu0 0
      %1730 = vmatpush1.bf16.msra.mxu0 0
      %1731 = vmatprep.subr.bf16.mxu0 0
      %1732 = vmatpush1.bf16.msra.mxu0 0
      %1733 = vmatprep.subr.bf16.mxu0 0
      %1734 = vmatpush1.bf16.msra.mxu0 0
      %1735 = vmatprep.subr.bf16.mxu0 0
      %1736 = vmatpush1.bf16.msra.mxu0 %v1305
      %1737 = vmatprep.subr.bf16.mxu0 0
      %1738 = vmatpush2.bf16.msra.mxu0 0
      %1739 = vmatprep.subr.bf16.mxu0 0
      %1740 = vmatpush2.bf16.msra.mxu0 0
      %1741 = vmatprep.subr.bf16.mxu0 0
      %1742 = vmatpush2.bf16.msra.mxu0 0
      %1743 = vmatprep.subr.bf16.mxu0 0
      %1744 = vmatpush2.bf16.msra.mxu0 0
      %1745 = vmatprep.subr.bf16.mxu0 0
      %1746 = vmatpush2.bf16.msra.mxu0 0
      %1747 = vmatprep.subr.bf16.mxu0 0
      %1748 = vmatpush2.bf16.msra.mxu0 0
      %1749 = vmatprep.subr.bf16.mxu0 0
      %1750 = vmatpush2.bf16.msra.mxu0 0
      %1751 = vmatprep.subr.bf16.mxu0 0
      %1752 = vmatpush2.bf16.msra.mxu0 0
      %1753 = vmatprep.mubr.bf16.mxu0 0
      %1754 = vmatmul.mubr.bf16.gmra.mxu0 %v1719
      %v1755 = vpop.f32.mrf.mxu0
      %v1756 = vadd.f32 0.0, %v1755
      %v1757 = vpop.f32.mrf.mxu0
      %v1758 = vpop.f32.mrf.mxu0
      %v1759 = vadd.f32 0.0, %v1758
      %v1760 = vpop.f32.mrf.mxu0
      %1761 = vdwg.mxu0
      %v1762 = vpack.c.bf16 %v1627, %v1624
      %v1763 = vpack.c.bf16 %v1671, %v1668
      %v1764 = vpack.c.bf16 %v1715, %v1712
      %v1765 = vpack.c.bf16 %v1759, %v1756
      %s1766 = scalar_lea.vmem %s2, 8
      %v1767 = vld [vmem:[%s1766] sm:$0xf]
      %v1768 = vld [vmem:[%s1766 + $0x4] sm:$0xf]
      %v1771 = vunpack.c.l.b16 %v1767
      %v1772 = vunpack.c.l.b16 %v1768
      %v1773 = vpack.c.b16 %v1772, %v1771
      %v1776 = vsel %vm585, %v1762, 0
      %v1779 = vsel %vm585, %v1763, 0
      %v1782 = vsel %vm585, %v1764, 0
      %v1785 = vsel %vm585, %v1765, 0
      %1787 = vmatprep.subr.bf16.mxu0 0
      %1788 = vmatpush1.bf16.msra.mxu0 0
      %1789 = vmatprep.subr.bf16.mxu0 0
      %1790 = vmatpush1.bf16.msra.mxu0 0
      %1791 = vmatprep.subr.bf16.mxu0 0
      %1792 = vmatpush1.bf16.msra.mxu0 0
      %1793 = vmatprep.subr.bf16.mxu0 0
      %1794 = vmatpush1.bf16.msra.mxu0 0
      %1795 = vmatprep.subr.bf16.mxu0 0
      %1796 = vmatpush1.bf16.msra.mxu0 0
      %1797 = vmatprep.subr.bf16.mxu0 0
      %1798 = vmatpush1.bf16.msra.mxu0 0
      %1799 = vmatprep.subr.bf16.mxu0 0
      %1800 = vmatpush1.bf16.msra.mxu0 0
      %1801 = vmatprep.subr.bf16.mxu0 0
      %1802 = vmatpush1.bf16.msra.mxu0 %v1773
      %1803 = vmatprep.subr.bf16.mxu0 0
      %1804 = vmatpush2.bf16.msra.mxu0 0
      %1805 = vmatprep.subr.bf16.mxu0 0
      %1806 = vmatpush2.bf16.msra.mxu0 0
      %1807 = vmatprep.subr.bf16.mxu0 0
      %1808 = vmatpush2.bf16.msra.mxu0 0
      %1809 = vmatprep.subr.bf16.mxu0 0
      %1810 = vmatpush2.bf16.msra.mxu0 0
      %1811 = vmatprep.subr.bf16.mxu0 0
      %1812 = vmatpush2.bf16.msra.mxu0 0
      %1813 = vmatprep.subr.bf16.mxu0 0
      %1814 = vmatpush2.bf16.msra.mxu0 0
      %1815 = vmatprep.subr.bf16.mxu0 0
      %1816 = vmatpush2.bf16.msra.mxu0 0
      %1817 = vmatprep.subr.bf16.mxu0 0
      %1818 = vmatpush2.bf16.msra.mxu0 0
      %1819 = vmatprep.mubr.bf16.mxu0 0
      %1820 = vmatmul.mubr.bf16.gmra.mxu0 %v1776
      %v1821 = vpop.f32.mrf.mxu0
      %v1822 = vadd.f32 0.0, %v1821
      %v1823 = vpop.f32.mrf.mxu0
      %v1824 = vpop.f32.mrf.mxu0
      %v1825 = vadd.f32 0.0, %v1824
      %v1826 = vpop.f32.mrf.mxu0
      %1827 = vmatprep.mubr.bf16.mxu0 0
      %1828 = vmatmul.mubr.bf16.gmra.mxu0 %v1779
      %v1829 = vpop.f32.mrf.mxu0
      %v1830 = vadd.f32 0.0, %v1829
      %v1831 = vpop.f32.mrf.mxu0
      %v1832 = vpop.f32.mrf.mxu0
      %v1833 = vadd.f32 0.0, %v1832
      %v1834 = vpop.f32.mrf.mxu0
      %1835 = vmatprep.mubr.bf16.mxu0 0
      %1836 = vmatmul.mubr.bf16.gmra.mxu0 %v1782
      %v1837 = vpop.f32.mrf.mxu0
      %v1838 = vadd.f32 0.0, %v1837
      %v1839 = vpop.f32.mrf.mxu0
      %v1840 = vpop.f32.mrf.mxu0
      %v1841 = vadd.f32 0.0, %v1840
      %v1842 = vpop.f32.mrf.mxu0
      %1843 = vmatprep.mubr.bf16.mxu0 0
      %1844 = vmatmul.mubr.bf16.gmra.mxu0 %v1785
      %v1845 = vpop.f32.mrf.mxu0
      %v1846 = vadd.f32 0.0, %v1845
      %v1847 = vpop.f32.mrf.mxu0
      %v1848 = vpop.f32.mrf.mxu0
      %v1849 = vadd.f32 0.0, %v1848
      %v1850 = vpop.f32.mrf.mxu0
      %1851 = vdwg.mxu0
      %v1854 = vunpack.c.l.b16 %v1046
      %v1855 = vunpack.c.l.b16 %v1047
      %v1856 = vpack.c.b16 %v1855, %v1854
      %v1859 = vsel %vm585, %v1042, 0
      %v1862 = vsel %vm585, %v1043, 0
      %v1865 = vsel %vm585, %v1044, 0
      %v1868 = vsel %vm585, %v1045, 0
      %1870 = vmatprep.subr.bf16.mxu0 0
      %1871 = vmatpush1.bf16.msra.mxu0 0
      %1872 = vmatprep.subr.bf16.mxu0 0
      %1873 = vmatpush1.bf16.msra.mxu0 0
      %1874 = vmatprep.subr.bf16.mxu0 0
      %1875 = vmatpush1.bf16.msra.mxu0 0
      %1876 = vmatprep.subr.bf16.mxu0 0
      %1877 = vmatpush1.bf16.msra.mxu0 0
      %1878 = vmatprep.subr.bf16.mxu0 0
      %1879 = vmatpush1.bf16.msra.mxu0 0
      %1880 = vmatprep.subr.bf16.mxu0 0
      %1881 = vmatpush1.bf16.msra.mxu0 0
      %1882 = vmatprep.subr.bf16.mxu0 0
      %1883 = vmatpush1.bf16.msra.mxu0 0
      %1884 = vmatprep.subr.bf16.mxu0 0
      %1885 = vmatpush1.bf16.msra.mxu0 %v1856
      %1886 = vmatprep.subr.bf16.mxu0 0
      %1887 = vmatpush2.bf16.msra.mxu0 0
      %1888 = vmatprep.subr.bf16.mxu0 0
      %1889 = vmatpush2.bf16.msra.mxu0 0
      %1890 = vmatprep.subr.bf16.mxu0 0
      %1891 = vmatpush2.bf16.msra.mxu0 0
      %1892 = vmatprep.subr.bf16.mxu0 0
      %1893 = vmatpush2.bf16.msra.mxu0 0
      %1894 = vmatprep.subr.bf16.mxu0 0
      %1895 = vmatpush2.bf16.msra.mxu0 0
      %1896 = vmatprep.subr.bf16.mxu0 0
      %1897 = vmatpush2.bf16.msra.mxu0 0
      %1898 = vmatprep.subr.bf16.mxu0 0
      %1899 = vmatpush2.bf16.msra.mxu0 0
      %1900 = vmatprep.subr.bf16.mxu0 0
      %1901 = vmatpush2.bf16.msra.mxu0 0
      %1902 = vmatprep.mubr.bf16.mxu0 0
      %1903 = vmatmul.mubr.bf16.gmra.mxu0 %v1859
      %v1904 = vpop.f32.mrf.mxu0
      %v1905 = vadd.f32 %v1822, %v1904
      %v1906 = vpop.f32.mrf.mxu0
      %v1907 = vpop.f32.mrf.mxu0
      %v1908 = vadd.f32 %v1825, %v1907
      %v1909 = vpop.f32.mrf.mxu0
      %1910 = vmatprep.mubr.bf16.mxu0 0
      %1911 = vmatmul.mubr.bf16.gmra.mxu0 %v1862
      %v1912 = vpop.f32.mrf.mxu0
      %v1913 = vadd.f32 %v1830, %v1912
      %v1914 = vpop.f32.mrf.mxu0
      %v1915 = vpop.f32.mrf.mxu0
      %v1916 = vadd.f32 %v1833, %v1915
      %v1917 = vpop.f32.mrf.mxu0
      %1918 = vmatprep.mubr.bf16.mxu0 0
      %1919 = vmatmul.mubr.bf16.gmra.mxu0 %v1865
      %v1920 = vpop.f32.mrf.mxu0
      %v1921 = vadd.f32 %v1838, %v1920
      %v1922 = vpop.f32.mrf.mxu0
      %v1923 = vpop.f32.mrf.mxu0
      %v1924 = vadd.f32 %v1841, %v1923
      %v1925 = vpop.f32.mrf.mxu0
      %1926 = vmatprep.mubr.bf16.mxu0 0
      %1927 = vmatmul.mubr.bf16.gmra.mxu0 %v1868
      %v1928 = vpop.f32.mrf.mxu0
      %v1929 = vadd.f32 %v1846, %v1928
      %v1930 = vpop.f32.mrf.mxu0
      %v1931 = vpop.f32.mrf.mxu0
      %v1932 = vadd.f32 %v1849, %v1931
      %v1933 = vpop.f32.mrf.mxu0
      %1934 = vdwg.mxu0
      %v1935 = vld [vmem:[%s3] sm:$0x1]
      %v1937 = vlaneseq
      %v1938 = vshrl.u32 %v1937, 7
      %v1939 = vsub.s32 0, %v1938
      %v1940 = vrot.slane %v1935, %v1939
      %v1942 = vadd.f32 %v1905, %v1940
      %v1943 = vadd.f32 %v1908, %v1940
      %v1944 = vadd.f32 %v1913, %v1940
      %v1945 = vadd.f32 %v1916, %v1940
      %v1946 = vadd.f32 %v1921, %v1940
      %v1947 = vadd.f32 %v1924, %v1940
      %v1948 = vadd.f32 %v1929, %v1940
      %v1949 = vadd.f32 %v1932, %v1940
      %v1950 = vadd.f32 %v1942, %v295
      %v1951 = vadd.f32 %v1943, %v296
      %v1952 = vadd.f32 %v1944, %v297
      %v1953 = vadd.f32 %v1945, %v298
      %v1954 = vadd.f32 %v1946, %v299
      %v1955 = vadd.f32 %v1947, %v300
      %v1956 = vadd.f32 %v1948, %v301
      %v1957 = vadd.f32 %v1949, %v302
      %1958 = vst.msk [vmem:[%s292] sm:$0xff] %vm331, %v1950
      %1959 = vst.msk [vmem:[%s292 + $0x8] sm:$0xff] %vm331, %v1951
      %1960 = vst.msk [vmem:[%s292 + $0x10] sm:$0xff] %vm331, %v1952
      %1961 = vst.msk [vmem:[%s292 + $0x18] sm:$0xff] %vm331, %v1953
      %1962 = vst.msk [vmem:[%s292 + $0x20] sm:$0xff] %vm331, %v1954
      %1963 = vst.msk [vmem:[%s292 + $0x28] sm:$0xff] %vm331, %v1955
      %1964 = vst.msk [vmem:[%s292 + $0x30] sm:$0xff] %vm331, %v1956
      %1965 = vst.msk [vmem:[%s292 + $0x38] sm:$0xff] %vm331, %v1957
      %s1966 = smul.u32 4, %s20
      %p1967 = scmp.lt.s32.totalorder %s21, 1
      %s1968 = scalar_select %p1967, %s21, 1
      %p1969 = scmp.lt.s32.totalorder %s1966, 3
      %s1970 = scalar_select %p1969, %s1966, 3
      %s1971 = smul.addr %s1970, 2
      %s1972 = smul.addr %s1968, 8
      %s1973 = sadd.s32 %s1971, %s1972
      %s1974 = smul.addr %s1973, 8
      %s1975 = scalar_lea.vmem %s5, %s1974
      // Predicated region
      $region41: #{residual_window_attention_forward.1} parent=39 // pred_check
        %p1976 = pneg %p165
      $region42: #{residual_window_attention_forward.1} parent=39 // pred_check_branch
        %1978 = sbr.rel (%p1976) target = $region44
      $region43: #{residual_window_attention_forward.1} parent=39 // pred_region
        %s1979 = smul.u32 4, %s20
      $region44: #{residual_window_attention_forward.1} parent=39 // pred_fallthru
        _
    $region40: #{residual_window_attention_forward.1} parent=5 // pred_fallthru
      _
    %p1980 = scmp.le.s32.totalorder 2, %s11
    // Predicated region
    $region45: #{residual_window_attention_forward.1} parent=5 // pred_check
      %p1981 = pneg %p1980
    $region46: #{residual_window_attention_forward.1} parent=5 // pred_check_branch
      %1983 = sbr.rel (%p1981) target = $region48
    $region47: #{residual_window_attention_forward.1} parent=5 // pred_region
      %s1984 = ssub.s32 %s11, 2
      // Predicated region
      $region49: #{residual_window_attention_forward.1} parent=47 // pred_check
        %p1985 = pneg %p171
      $region50: #{residual_window_attention_forward.1} parent=47 // pred_check_branch
        %1987 = sbr.rel (%p1985) target = $region52
      $region51: #{residual_window_attention_forward.1} parent=47 // pred_region
        %s1988 = smul.u32 4, %s22
        %p1989 = scmp.lt.s32.totalorder %s23, 1
        %s1990 = scalar_select %p1989, %s23, 1
        %p1991 = scmp.lt.s32.totalorder %s1988, 3
        %s1992 = scalar_select %p1991, %s1988, 3
        %s1993 = smul.addr %s1992, 2
        %s1994 = smul.addr %s1990, 8
        %s1995 = sadd.s32 %s1993, %s1994
        %s1996 = smul.addr %s1995, 8
        %s1997 = scalar_lea.vmem %s5, %s1996
      $region52: #{residual_window_attention_forward.1} parent=47 // pred_fallthru
        _
    $region48: #{residual_window_attention_forward.1} parent=5 // pred_fallthru
      _
  $region6: #{residual_window_attention_forward.1} parent=0 // loop_footer
    %s15 = sadd.s32 1, %s11
  $region7: #{residual_window_attention_forward.1} parent=0 // loop_footer_branch
    %10 = sbr.rel target = $region3
  $region8: #{residual_window_attention_forward.1} parent=0 // loop_exit
    _

</llo_original>
